<compile_context>
chip_gen: v5e
topology: v5e:2x2
jax: 0.10.0
libtpu: 0.0.40
codegen_flags: <defaults>
</compile_context>

<pallas_src>
import functools

import jax
import jax.numpy as jnp
from jax.experimental import pallas as pl
from jax.experimental.pallas import tpu as pltpu

# ------------------------- problem sizes (small) ----------------------------
B, S, E, H, V = 2, 8, 16, 32, 20          # batch, src_len, emb, hidden, vocab
V_PAD = 128                               # lane-dense logits; sliced back to V
PAD, SOS, EOS = 0, 1, 2
TGT_LEN = 6

# Matmul operand dtype. f32 keeps numerics closest to the PyTorch reference;
# on v6e/v7x set to jnp.bfloat16 (accumulation stays f32 via
# preferred_element_type) to halve weight DMA and ~2x MXU throughput.
COMPUTE_DTYPE = jnp.float32


# ------------------------------ shared math ---------------------------------
def _mm(a, b):
    return jnp.dot(a.astype(COMPUTE_DTYPE), b.astype(COMPUTE_DTYPE),
                   preferred_element_type=jnp.float32)


def _bmm(spec, a, b):
    # batched matmul on the MXU (same 3D einsum pattern as flash attention)
    return jnp.einsum(spec, a.astype(COMPUTE_DTYPE), b.astype(COMPUTE_DTYPE),
                      preferred_element_type=jnp.float32)


def _sigmoid(x):
    # single EUP transcendental (tanh) instead of exp + add + divide chain
    return 0.5 * (jnp.tanh(0.5 * x) + 1.0)


def _lstm_cell(gates, c):
    # gates: (B, 4H) laid out [i | f | g | o]
    h_dim = c.shape[-1]
    i = _sigmoid(gates[:, 0 * h_dim:1 * h_dim])
    f = _sigmoid(gates[:, 1 * h_dim:2 * h_dim])
    g = jnp.tanh(gates[:, 2 * h_dim:3 * h_dim])
    o = _sigmoid(gates[:, 3 * h_dim:4 * h_dim])
    c_new = f * c + i * g
    h_new = o * jnp.tanh(c_new)
    return h_new, c_new


# --------------- encoder LSTM: single invocation, unrolled in-kernel --------
def encoder_kernel(x_ref, wih_ref, whh_ref, b_ref, out_ref, hN_ref, cN_ref):
    # x_ref: (B, S, E) batch-major; out_ref: (B, S, H) batch-major.
    b_, s_, _ = x_ref.shape
    h_dim = whh_ref.shape[0]
    wih = wih_ref[...]
    whh = whh_ref[...]
    bias = b_ref[...]
    h = jnp.zeros((b_, h_dim), jnp.float32)
    c = jnp.zeros((b_, h_dim), jnp.float32)
    # S is tiny and static -> full unroll with static indices; the whole
    # recurrence is visible to the scheduler, no per-step grid overhead.
    for t in range(s_):
        x = x_ref[:, t, :]                                   # (B, E)
        gates = _mm(x, wih) + _mm(h, whh) + bias
        h, c = _lstm_cell(gates, c)
        out_ref[:, t, :] = h
    hN_ref[...] = h
    cN_ref[...] = c


def run_encoder(x_emb, wih, whh, b):
    b_, s_, _ = x_emb.shape
    h_dim = whh.shape[0]
    out_shapes = (
        jax.ShapeDtypeStruct((b_, s_, h_dim), jnp.float32),  # enc outputs (B,S,H)
        jax.ShapeDtypeStruct((b_, h_dim), jnp.float32),      # final hidden
        jax.ShapeDtypeStruct((b_, h_dim), jnp.float32),      # final cell
    )
    # TODO(synk): like the previous version, padded timesteps still feed the
    # recurrence (pack_padded_sequence semantics not reproduced); padding only
    # affects the attention mask.
    return pl.pallas_call(encoder_kernel, out_shape=out_shapes)(x_emb, wih, whh, b)


# --------- fused decoder: attention + LSTM cell + fc, grid over time --------
def decoder_fused_kernel(emb_ref, enc_ref, mask_ref, h0_ref, c0_ref,
                         watt_ref, wie_ref, wic_ref, whh_ref, b_ref,
                         wfh_ref, wfc_ref, bfc_ref,
                         logits_ref, h_scr, c_scr):
    t = pl.program_id(0)

    @pl.when(t == 0)
    def _():
        h_scr[...] = h0_ref[...]
        c_scr[...] = c0_ref[...]

    emb = emb_ref[0]              # (B, E) current-step teacher-forced embedding
    h = h_scr[...]                # (B, H)
    c = c_scr[...]                # (B, H)
    enc = enc_ref[...]            # (B, S, H)
    mask = mask_ref[...]          # (B, S) in {0., 1.}

    # Luong "general" attention with masked softmax, via batched MXU matmuls.
    q = _mm(h, watt_ref[...])                                     # (B, H)
    scores = _bmm('bqh,bsh->bqs', q[:, None, :], enc)             # (B, 1, S)
    scores = jnp.where(mask[:, None, :] > 0.5, scores, -1e9)
    scores = scores - jnp.max(scores, axis=-1, keepdims=True)
    e = jnp.exp(scores)
    attn = e * pl.reciprocal(jnp.sum(e, axis=-1, keepdims=True), approx=True)
    ctx = _bmm('bqs,bsh->bqh', attn, enc)[:, 0, :]                # (B, H)

    # LSTM cell on [embedding ; context] (split matmuls; concat of 16/32-lane
    # operands along lanes risks unaligned-concat lowering, so kept split).
    gates = (_mm(emb, wie_ref[...]) + _mm(ctx, wic_ref[...])
             + _mm(h, whh_ref[...]) + b_ref[...])
    h_new, c_new = _lstm_cell(gates, c)
    h_scr[...] = h_new
    c_scr[...] = c_new

    # fc([h_new ; context]) -> lane-padded vocab logits (full-lane store)
    logits_ref[0] = (_mm(h_new, wfh_ref[...]) + _mm(ctx, wfc_ref[...])
                     + bfc_ref[...])


def run_decoder_fused(emb_all, enc_out, enc_mask, h0, c0, p):
    td, b_, e_ = emb_all.shape
    _, s_, h_dim = enc_out.shape
    v_pad = p['w_fc_h'].shape[1]
    return pl.pallas_call(
        decoder_fused_kernel,
        out_shape=jax.ShapeDtypeStruct((td, b_, v_pad), jnp.float32),
        grid=(td,),
        in_specs=[
            pl.BlockSpec((1, b_, e_), lambda t: (t, 0, 0)),        # per-step emb
            pl.BlockSpec((b_, s_, h_dim), lambda t: (0, 0, 0)),    # enc outputs (resident)
            pl.BlockSpec((b_, s_), lambda t: (0, 0)),              # mask (resident)
            pl.BlockSpec((b_, h_dim), lambda t: (0, 0)),           # h0
            pl.BlockSpec((b_, h_dim), lambda t: (0, 0)),           # c0
            pl.BlockSpec((h_dim, h_dim), lambda t: (0, 0)),        # w_att
            pl.BlockSpec((e_, 4 * h_dim), lambda t: (0, 0)),       # w_ih_dec_e
            pl.BlockSpec((h_dim, 4 * h_dim), lambda t: (0, 0)),    # w_ih_dec_c
            pl.BlockSpec((h_dim, 4 * h_dim), lambda t: (0, 0)),    # w_hh_dec
            pl.BlockSpec((1, 4 * h_dim), lambda t: (0, 0)),        # b_dec
            pl.BlockSpec((h_dim, v_pad), lambda t: (0, 0)),        # w_fc_h (padded)
            pl.BlockSpec((h_dim, v_pad), lambda t: (0, 0)),        # w_fc_c (padded)
            pl.BlockSpec((1, v_pad), lambda t: (0, 0)),            # b_fc   (padded)
        ],
        out_specs=pl.BlockSpec((1, b_, v_pad), lambda t: (t, 0, 0)),
        scratch_shapes=[pltpu.VMEM((b_, h_dim), jnp.float32),      # h state
                        pltpu.VMEM((b_, h_dim), jnp.float32)],     # c state
        compiler_params=pltpu.CompilerParams(
            dimension_semantics=("arbitrary",)),
    )(emb_all, enc_out, enc_mask, h0, c0,
      p['w_att'], p['w_ih_dec_e'], p['w_ih_dec_c'], p['w_hh_dec'], p['b_dec'],
      p['w_fc_h'], p['w_fc_c'], p['b_fc'])


# ------------------------------ Seq2Seq.forward ------------------------------
@jax.jit
def _forward_train(params, src, tgt, sos_id, pad_idx):
    batch_size, _ = src.shape
    tgt_len = tgt.shape[1]
    vocab = params['emb_dec'].shape[0]

    src_mask = (src != pad_idx)
    lengths = jnp.sum(src_mask.astype(jnp.int32), axis=1)

    # ---- encoder: one pallas_call, recurrence fully unrolled in-kernel -----
    x_emb = jnp.take(params['emb_enc'], src, axis=0).astype(jnp.float32)   # (B,S,E)
    enc_out, hidden, cell = run_encoder(
        x_emb, params['w_ih_enc'], params['w_hh_enc'], params['b_enc'])

    max_len = enc_out.shape[1]
    enc_mask = (jnp.arange(max_len)[None, :] < lengths[:, None]).astype(jnp.float32)

    # ---- decoder: all (tgt_len-1) steps fused into one pallas_call ---------
    # deterministic teacher forcing: step inputs are [SOS, tgt[:,1:tgt_len-1]]
    dec_tokens = jnp.concatenate(
        [jnp.full((batch_size, 1), sos_id, dtype=tgt.dtype),
         tgt[:, 1:tgt_len - 1]], axis=1)                           # (B, T-1)
    emb_all = jnp.take(params['emb_dec'], dec_tokens.T, axis=0).astype(jnp.float32)

    logits_pad = run_decoder_fused(emb_all, enc_out, enc_mask, hidden, cell, params)
    logits = jnp.transpose(logits_pad, (1, 0, 2))[:, :, :vocab]    # (B, T-1, V)

    # outputs[:, 0] stays zero, as in the reference
    return jnp.concatenate(
        [jnp.zeros((batch_size, 1, vocab), jnp.float32), logits], axis=1)


def seq2seq_forward(params, src, tgt, token_to_id, pad_idx=PAD,
                    teacher_forcing_ratio=1.0, training=True):
    # TODO(synk): stochastic teacher forcing (random.random()) and the
    # inference-time EOS early-break are host-side control flow; only the
    # deterministic training path (ratio=1.0, teacher forcing) is implemented.
    del teacher_forcing_ratio, training
    return _forward_train(params, src, tgt, token_to_id['<SOS>'], pad_idx)


# ------------------------------- parameters ----------------------------------
def init_params(key):
    ks = jax.random.split(key, 13)

    def w(k, shape, scale=0.1):
        return (scale * jax.random.normal(k, shape)).astype(jnp.float32)

    def pad_v(x):  # zero-pad the vocab dim to a full 128-lane width
        return jnp.pad(x, ((0, 0), (0, V_PAD - V)))

    p = {
        'emb_enc':    w(ks[0], (V, E)),
        'emb_dec':    w(ks[1], (V, E)),
        'w_ih_enc':   w(ks[2], (E, 4 * H)),
        'w_hh_enc':   w(ks[3], (H, 4 * H)),
        'b_enc':      w(ks[4], (1, 4 * H)),
        'w_att':      w(ks[5], (H, H)),
        'w_ih_dec_e': w(ks[6], (E, 4 * H)),
        'w_ih_dec_c': w(ks[7], (H, 4 * H)),
        'w_hh_dec':   w(ks[8], (H, 4 * H)),
        'b_dec':      w(ks[9], (1, 4 * H)),
        # fc weights / bias carry V zero-padded to 128 so the logits store is
        # an unmasked full-lane vst; true weights occupy the first V columns.
        'w_fc_h':     pad_v(w(ks[10], (H, V))),
        'w_fc_c':     pad_v(w(ks[11], (H, V))),
        'b_fc':       pad_v(w(ks[12], (1, V))),
    }
    # nn.Embedding(padding_idx=pad_idx): zero the pad row (encoder side)
    p['emb_enc'] = p['emb_enc'].at[PAD].set(0.0)
    # TODO(synk): zero emb_dec[PAD] too if the reference decoder embedding
    # also uses padding_idx (decoder inputs never hit PAD in this test).
    return p


if __name__ == "__main__":
    key = jax.random.PRNGKey(0)
    kp, ks, kt = jax.random.split(key, 3)
    params = init_params(kp)
    token_to_id = {'<PAD>': PAD, '<SOS>': SOS, '<EOS>': EOS}

    src = jax.random.randint(ks, (B, S), 3, V).astype(jnp.int32)
    src = src.at[1, 5:].set(PAD)                 # padding to exercise the mask
    tgt = jax.random.randint(kt, (B, TGT_LEN), 3, V).astype(jnp.int32)
    tgt = tgt.at[:, 0].set(SOS)

    out = seq2seq_forward(params, src, tgt, token_to_id, pad_idx=PAD,
                          teacher_forcing_ratio=1.0, training=True)
    jax.block_until_ready(out)
    assert out.shape == (B, TGT_LEN, V) and out.dtype == jnp.float32
    print("KERNEL_OK")
</pallas_src>

<mosaic_0001>
module attributes {stable_mosaic.version = 11 : i64} {
  func.func @encoder_kernel(%arg0: memref<2x8x16xf32, #tpu.memory_space<vmem>>, %arg1: memref<16x128xf32, #tpu.memory_space<vmem>>, %arg2: memref<32x128xf32, #tpu.memory_space<vmem>>, %arg3: memref<1x128xf32, #tpu.memory_space<vmem>>, %arg4: memref<2x8x32xf32, #tpu.memory_space<vmem>>, %arg5: memref<2x32xf32, #tpu.memory_space<vmem>>, %arg6: memref<2x32xf32, #tpu.memory_space<vmem>>) attributes {dimension_semantics = [], scalar_prefetch = 0 : i64, scratch_operands = 0 : i64, tpu.core_type = #tpu.core_type<tc>} {
    %c0 = arith.constant 0 : index
    %c0_0 = arith.constant 0 : index
    %0 = vector.load %arg1[%c0, %c0_0] : memref<16x128xf32, #tpu.memory_space<vmem>>, vector<16x128xf32>
    %c0_1 = arith.constant 0 : index
    %c0_2 = arith.constant 0 : index
    %1 = vector.load %arg2[%c0_1, %c0_2] : memref<32x128xf32, #tpu.memory_space<vmem>>, vector<32x128xf32>
    %c0_3 = arith.constant 0 : index
    %c0_4 = arith.constant 0 : index
    %2 = vector.load %arg3[%c0_3, %c0_4] : memref<1x128xf32, #tpu.memory_space<vmem>>, vector<1x128xf32>
    %cst = arith.constant 0.000000e+00 : f32
    %3 = vector.broadcast %cst : f32 to vector<2x32xf32>
    %cst_5 = arith.constant 0.000000e+00 : f32
    %4 = vector.broadcast %cst_5 : f32 to vector<2x32xf32>
    %c0_6 = arith.constant 0 : index
    %c0_7 = arith.constant 0 : index
    %c0_8 = arith.constant 0 : index
    %5 = vector.load %arg0[%c0_6, %c0_7, %c0_8] : memref<2x8x16xf32, #tpu.memory_space<vmem>>, vector<2x1x16xf32>
    %6 = vector.shape_cast %5 : vector<2x1x16xf32> to vector<2x16xf32>
    %cst_9 = arith.constant dense<0.000000e+00> : vector<2x128xf32>
    %7 = tpu.matmul %6, %0, %cst_9 {dimension_numbers = #tpu.dot_dimension_numbers<[1], [0], [0], [1], [0, 0, 1, 1], [], []>} : vector<2x16xf32>, vector<16x128xf32>, vector<2x128xf32> -> vector<2x128xf32>
    %cst_10 = arith.constant dense<0.000000e+00> : vector<2x128xf32>
    %8 = tpu.matmul %3, %1, %cst_10 {dimension_numbers = #tpu.dot_dimension_numbers<[1], [0], [0], [1], [0, 0, 1, 1], [], []>} : vector<2x32xf32>, vector<32x128xf32>, vector<2x128xf32> -> vector<2x128xf32>
    %9 = arith.addf %7, %8 : vector<2x128xf32>
    %10 = vector.broadcast %2 : vector<1x128xf32> to vector<2x128xf32>
    %11 = arith.addf %9, %10 : vector<2x128xf32>
    %12 = vector.extract_strided_slice %11 {offsets = [0, 0], sizes = [2, 32], strides = [1, 1]} : vector<2x128xf32> to vector<2x32xf32>
    %cst_11 = arith.constant 5.000000e-01 : f32
    %13 = vector.broadcast %cst_11 : f32 to vector<2x32xf32>
    %14 = arith.mulf %13, %12 : vector<2x32xf32>
    %15 = math.tanh %14 : vector<2x32xf32>
    %cst_12 = arith.constant 1.000000e+00 : f32
    %16 = vector.broadcast %cst_12 : f32 to vector<2x32xf32>
    %17 = arith.addf %15, %16 : vector<2x32xf32>
    %cst_13 = arith.constant 5.000000e-01 : f32
    %18 = vector.broadcast %cst_13 : f32 to vector<2x32xf32>
    %19 = arith.mulf %18, %17 : vector<2x32xf32>
    %20 = vector.extract_strided_slice %11 {offsets = [0, 32], sizes = [2, 32], strides = [1, 1]} : vector<2x128xf32> to vector<2x32xf32>
    %cst_14 = arith.constant 5.000000e-01 : f32
    %21 = vector.broadcast %cst_14 : f32 to vector<2x32xf32>
    %22 = arith.mulf %21, %20 : vector<2x32xf32>
    %23 = math.tanh %22 : vector<2x32xf32>
    %cst_15 = arith.constant 1.000000e+00 : f32
    %24 = vector.broadcast %cst_15 : f32 to vector<2x32xf32>
    %25 = arith.addf %23, %24 : vector<2x32xf32>
    %cst_16 = arith.constant 5.000000e-01 : f32
    %26 = vector.broadcast %cst_16 : f32 to vector<2x32xf32>
    %27 = arith.mulf %26, %25 : vector<2x32xf32>
    %28 = vector.extract_strided_slice %11 {offsets = [0, 64], sizes = [2, 32], strides = [1, 1]} : vector<2x128xf32> to vector<2x32xf32>
    %29 = math.tanh %28 : vector<2x32xf32>
    %30 = vector.extract_strided_slice %11 {offsets = [0, 96], sizes = [2, 32], strides = [1, 1]} : vector<2x128xf32> to vector<2x32xf32>
    %cst_17 = arith.constant 5.000000e-01 : f32
    %31 = vector.broadcast %cst_17 : f32 to vector<2x32xf32>
    %32 = arith.mulf %31, %30 : vector<2x32xf32>
    %33 = math.tanh %32 : vector<2x32xf32>
    %cst_18 = arith.constant 1.000000e+00 : f32
    %34 = vector.broadcast %cst_18 : f32 to vector<2x32xf32>
    %35 = arith.addf %33, %34 : vector<2x32xf32>
    %cst_19 = arith.constant 5.000000e-01 : f32
    %36 = vector.broadcast %cst_19 : f32 to vector<2x32xf32>
    %37 = arith.mulf %36, %35 : vector<2x32xf32>
    %38 = arith.mulf %27, %4 : vector<2x32xf32>
    %39 = arith.mulf %19, %29 : vector<2x32xf32>
    %40 = arith.addf %38, %39 : vector<2x32xf32>
    %41 = math.tanh %40 : vector<2x32xf32>
    %42 = arith.mulf %37, %41 : vector<2x32xf32>
    %c0_20 = arith.constant 0 : index
    %c0_21 = arith.constant 0 : index
    %c0_22 = arith.constant 0 : index
    %43 = vector.load %arg4[%c0_20, %c0_21, %c0_22] : memref<2x8x32xf32, #tpu.memory_space<vmem>>, vector<2x1x32xf32>
    %44 = vector.shape_cast %43 : vector<2x1x32xf32> to vector<2x32xf32>
    %45 = vector.shape_cast %42 : vector<2x32xf32> to vector<2x1x32xf32>
    tpu.vector_store %arg4[%c0_20, %c0_21, %c0_22], %45 {strides = array<i32>} : memref<2x8x32xf32, #tpu.memory_space<vmem>>, vector<2x1x32xf32>,
    %c0_23 = arith.constant 0 : index
    %c1 = arith.constant 1 : index
    %c0_24 = arith.constant 0 : index
    %46 = vector.load %arg0[%c0_23, %c1, %c0_24] : memref<2x8x16xf32, #tpu.memory_space<vmem>>, vector<2x1x16xf32>
    %47 = vector.shape_cast %46 : vector<2x1x16xf32> to vector<2x16xf32>
    %cst_25 = arith.constant dense<0.000000e+00> : vector<2x128xf32>
    %48 = tpu.matmul %47, %0, %cst_25 {dimension_numbers = #tpu.dot_dimension_numbers<[1], [0], [0], [1], [0, 0, 1, 1], [], []>} : vector<2x16xf32>, vector<16x128xf32>, vector<2x128xf32> -> vector<2x128xf32>
    %cst_26 = arith.constant dense<0.000000e+00> : vector<2x128xf32>
    %49 = tpu.matmul %42, %1, %cst_26 {dimension_numbers = #tpu.dot_dimension_numbers<[1], [0], [0], [1], [0, 0, 1, 1], [], []>} : vector<2x32xf32>, vector<32x128xf32>, vector<2x128xf32> -> vector<2x128xf32>
    %50 = arith.addf %48, %49 : vector<2x128xf32>
    %51 = vector.broadcast %2 : vector<1x128xf32> to vector<2x128xf32>
    %52 = arith.addf %50, %51 : vector<2x128xf32>
    %53 = vector.extract_strided_slice %52 {offsets = [0, 0], sizes = [2, 32], strides = [1, 1]} : vector<2x128xf32> to vector<2x32xf32>
    %cst_27 = arith.constant 5.000000e-01 : f32
    %54 = vector.broadcast %cst_27 : f32 to vector<2x32xf32>
    %55 = arith.mulf %54, %53 : vector<2x32xf32>
    %56 = math.tanh %55 : vector<2x32xf32>
    %cst_28 = arith.constant 1.000000e+00 : f32
    %57 = vector.broadcast %cst_28 : f32 to vector<2x32xf32>
    %58 = arith.addf %56, %57 : vector<2x32xf32>
    %cst_29 = arith.constant 5.000000e-01 : f32
    %59 = vector.broadcast %cst_29 : f32 to vector<2x32xf32>
    %60 = arith.mulf %59, %58 : vector<2x32xf32>
    %61 = vector.extract_strided_slice %52 {offsets = [0, 32], sizes = [2, 32], strides = [1, 1]} : vector<2x128xf32> to vector<2x32xf32>
    %cst_30 = arith.constant 5.000000e-01 : f32
    %62 = vector.broadcast %cst_30 : f32 to vector<2x32xf32>
    %63 = arith.mulf %62, %61 : vector<2x32xf32>
    %64 = math.tanh %63 : vector<2x32xf32>
    %cst_31 = arith.constant 1.000000e+00 : f32
    %65 = vector.broadcast %cst_31 : f32 to vector<2x32xf32>
    %66 = arith.addf %64, %65 : vector<2x32xf32>
    %cst_32 = arith.constant 5.000000e-01 : f32
    %67 = vector.broadcast %cst_32 : f32 to vector<2x32xf32>
    %68 = arith.mulf %67, %66 : vector<2x32xf32>
    %69 = vector.extract_strided_slice %52 {offsets = [0, 64], sizes = [2, 32], strides = [1, 1]} : vector<2x128xf32> to vector<2x32xf32>
    %70 = math.tanh %69 : vector<2x32xf32>
    %71 = vector.extract_strided_slice %52 {offsets = [0, 96], sizes = [2, 32], strides = [1, 1]} : vector<2x128xf32> to vector<2x32xf32>
    %cst_33 = arith.constant 5.000000e-01 : f32
    %72 = vector.broadcast %cst_33 : f32 to vector<2x32xf32>
    %73 = arith.mulf %72, %71 : vector<2x32xf32>
    %74 = math.tanh %73 : vector<2x32xf32>
    %cst_34 = arith.constant 1.000000e+00 : f32
    %75 = vector.broadcast %cst_34 : f32 to vector<2x32xf32>
    %76 = arith.addf %74, %75 : vector<2x32xf32>
    %cst_35 = arith.constant 5.000000e-01 : f32
    %77 = vector.broadcast %cst_35 : f32 to vector<2x32xf32>
    %78 = arith.mulf %77, %76 : vector<2x32xf32>
    %79 = arith.mulf %68, %40 : vector<2x32xf32>
    %80 = arith.mulf %60, %70 : vector<2x32xf32>
    %81 = arith.addf %79, %80 : vector<2x32xf32>
    %82 = math.tanh %81 : vector<2x32xf32>
    %83 = arith.mulf %78, %82 : vector<2x32xf32>
    %c0_36 = arith.constant 0 : index
    %c1_37 = arith.constant 1 : index
    %c0_38 = arith.constant 0 : index
    %84 = vector.load %arg4[%c0_36, %c1_37, %c0_38] : memref<2x8x32xf32, #tpu.memory_space<vmem>>, vector<2x1x32xf32>
    %85 = vector.shape_cast %84 : vector<2x1x32xf32> to vector<2x32xf32>
    %86 = vector.shape_cast %83 : vector<2x32xf32> to vector<2x1x32xf32>
    tpu.vector_store %arg4[%c0_36, %c1_37, %c0_38], %86 {strides = array<i32>} : memref<2x8x32xf32, #tpu.memory_space<vmem>>, vector<2x1x32xf32>,
    %c0_39 = arith.constant 0 : index
    %c2 = arith.constant 2 : index
    %c0_40 = arith.constant 0 : index
    %87 = vector.load %arg0[%c0_39, %c2, %c0_40] : memref<2x8x16xf32, #tpu.memory_space<vmem>>, vector<2x1x16xf32>
    %88 = vector.shape_cast %87 : vector<2x1x16xf32> to vector<2x16xf32>
    %cst_41 = arith.constant dense<0.000000e+00> : vector<2x128xf32>
    %89 = tpu.matmul %88, %0, %cst_41 {dimension_numbers = #tpu.dot_dimension_numbers<[1], [0], [0], [1], [0, 0, 1, 1], [], []>} : vector<2x16xf32>, vector<16x128xf32>, vector<2x128xf32> -> vector<2x128xf32>
    %cst_42 = arith.constant dense<0.000000e+00> : vector<2x128xf32>
    %90 = tpu.matmul %83, %1, %cst_42 {dimension_numbers = #tpu.dot_dimension_numbers<[1], [0], [0], [1], [0, 0, 1, 1], [], []>} : vector<2x32xf32>, vector<32x128xf32>, vector<2x128xf32> -> vector<2x128xf32>
    %91 = arith.addf %89, %90 : vector<2x128xf32>
    %92 = vector.broadcast %2 : vector<1x128xf32> to vector<2x128xf32>
    %93 = arith.addf %91, %92 : vector<2x128xf32>
    %94 = vector.extract_strided_slice %93 {offsets = [0, 0], sizes = [2, 32], strides = [1, 1]} : vector<2x128xf32> to vector<2x32xf32>
    %cst_43 = arith.constant 5.000000e-01 : f32
    %95 = vector.broadcast %cst_43 : f32 to vector<2x32xf32>
    %96 = arith.mulf %95, %94 : vector<2x32xf32>
    %97 = math.tanh %96 : vector<2x32xf32>
    %cst_44 = arith.constant 1.000000e+00 : f32
    %98 = vector.broadcast %cst_44 : f32 to vector<2x32xf32>
    %99 = arith.addf %97, %98 : vector<2x32xf32>
    %cst_45 = arith.constant 5.000000e-01 : f32
    %100 = vector.broadcast %cst_45 : f32 to vector<2x32xf32>
    %101 = arith.mulf %100, %99 : vector<2x32xf32>
    %102 = vector.extract_strided_slice %93 {offsets = [0, 32], sizes = [2, 32], strides = [1, 1]} : vector<2x128xf32> to vector<2x32xf32>
    %cst_46 = arith.constant 5.000000e-01 : f32
    %103 = vector.broadcast %cst_46 : f32 to vector<2x32xf32>
    %104 = arith.mulf %103, %102 : vector<2x32xf32>
    %105 = math.tanh %104 : vector<2x32xf32>
    %cst_47 = arith.constant 1.000000e+00 : f32
    %106 = vector.broadcast %cst_47 : f32 to vector<2x32xf32>
    %107 = arith.addf %105, %106 : vector<2x32xf32>
    %cst_48 = arith.constant 5.000000e-01 : f32
    %108 = vector.broadcast %cst_48 : f32 to vector<2x32xf32>
    %109 = arith.mulf %108, %107 : vector<2x32xf32>
    %110 = vector.extract_strided_slice %93 {offsets = [0, 64], sizes = [2, 32], strides = [1, 1]} : vector<2x128xf32> to vector<2x32xf32>
    %111 = math.tanh %110 : vector<2x32xf32>
    %112 = vector.extract_strided_slice %93 {offsets = [0, 96], sizes = [2, 32], strides = [1, 1]} : vector<2x128xf32> to vector<2x32xf32>
    %cst_49 = arith.constant 5.000000e-01 : f32
    %113 = vector.broadcast %cst_49 : f32 to vector<2x32xf32>
    %114 = arith.mulf %113, %112 : vector<2x32xf32>
    %115 = math.tanh %114 : vector<2x32xf32>
    %cst_50 = arith.constant 1.000000e+00 : f32
    %116 = vector.broadcast %cst_50 : f32 to vector<2x32xf32>
    %117 = arith.addf %115, %116 : vector<2x32xf32>
    %cst_51 = arith.constant 5.000000e-01 : f32
    %118 = vector.broadcast %cst_51 : f32 to vector<2x32xf32>
    %119 = arith.mulf %118, %117 : vector<2x32xf32>
    %120 = arith.mulf %109, %81 : vector<2x32xf32>
    %121 = arith.mulf %101, %111 : vector<2x32xf32>
    %122 = arith.addf %120, %121 : vector<2x32xf32>
    %123 = math.tanh %122 : vector<2x32xf32>
    %124 = arith.mulf %119, %123 : vector<2x32xf32>
    %c0_52 = arith.constant 0 : index
    %c2_53 = arith.constant 2 : index
    %c0_54 = arith.constant 0 : index
    %125 = vector.load %arg4[%c0_52, %c2_53, %c0_54] : memref<2x8x32xf32, #tpu.memory_space<vmem>>, vector<2x1x32xf32>
    %126 = vector.shape_cast %125 : vector<2x1x32xf32> to vector<2x32xf32>
    %127 = vector.shape_cast %124 : vector<2x32xf32> to vector<2x1x32xf32>
    tpu.vector_store %arg4[%c0_52, %c2_53, %c0_54], %127 {strides = array<i32>} : memref<2x8x32xf32, #tpu.memory_space<vmem>>, vector<2x1x32xf32>,
    %c0_55 = arith.constant 0 : index
    %c3 = arith.constant 3 : index
    %c0_56 = arith.constant 0 : index
    %128 = vector.load %arg0[%c0_55, %c3, %c0_56] : memref<2x8x16xf32, #tpu.memory_space<vmem>>, vector<2x1x16xf32>
    %129 = vector.shape_cast %128 : vector<2x1x16xf32> to vector<2x16xf32>
    %cst_57 = arith.constant dense<0.000000e+00> : vector<2x128xf32>
    %130 = tpu.matmul %129, %0, %cst_57 {dimension_numbers = #tpu.dot_dimension_numbers<[1], [0], [0], [1], [0, 0, 1, 1], [], []>} : vector<2x16xf32>, vector<16x128xf32>, vector<2x128xf32> -> vector<2x128xf32>
    %cst_58 = arith.constant dense<0.000000e+00> : vector<2x128xf32>
    %131 = tpu.matmul %124, %1, %cst_58 {dimension_numbers = #tpu.dot_dimension_numbers<[1], [0], [0], [1], [0, 0, 1, 1], [], []>} : vector<2x32xf32>, vector<32x128xf32>, vector<2x128xf32> -> vector<2x128xf32>
    %132 = arith.addf %130, %131 : vector<2x128xf32>
    %133 = vector.broadcast %2 : vector<1x128xf32> to vector<2x128xf32>
    %134 = arith.addf %132, %133 : vector<2x128xf32>
    %135 = vector.extract_strided_slice %134 {offsets = [0, 0], sizes = [2, 32], strides = [1, 1]} : vector<2x128xf32> to vector<2x32xf32>
    %cst_59 = arith.constant 5.000000e-01 : f32
    %136 = vector.broadcast %cst_59 : f32 to vector<2x32xf32>
    %137 = arith.mulf %136, %135 : vector<2x32xf32>
    %138 = math.tanh %137 : vector<2x32xf32>
    %cst_60 = arith.constant 1.000000e+00 : f32
    %139 = vector.broadcast %cst_60 : f32 to vector<2x32xf32>
    %140 = arith.addf %138, %139 : vector<2x32xf32>
    %cst_61 = arith.constant 5.000000e-01 : f32
    %141 = vector.broadcast %cst_61 : f32 to vector<2x32xf32>
    %142 = arith.mulf %141, %140 : vector<2x32xf32>
    %143 = vector.extract_strided_slice %134 {offsets = [0, 32], sizes = [2, 32], strides = [1, 1]} : vector<2x128xf32> to vector<2x32xf32>
    %cst_62 = arith.constant 5.000000e-01 : f32
    %144 = vector.broadcast %cst_62 : f32 to vector<2x32xf32>
    %145 = arith.mulf %144, %143 : vector<2x32xf32>
    %146 = math.tanh %145 : vector<2x32xf32>
    %cst_63 = arith.constant 1.000000e+00 : f32
    %147 = vector.broadcast %cst_63 : f32 to vector<2x32xf32>
    %148 = arith.addf %146, %147 : vector<2x32xf32>
    %cst_64 = arith.constant 5.000000e-01 : f32
    %149 = vector.broadcast %cst_64 : f32 to vector<2x32xf32>
    %150 = arith.mulf %149, %148 : vector<2x32xf32>
    %151 = vector.extract_strided_slice %134 {offsets = [0, 64], sizes = [2, 32], strides = [1, 1]} : vector<2x128xf32> to vector<2x32xf32>
    %152 = math.tanh %151 : vector<2x32xf32>
    %153 = vector.extract_strided_slice %134 {offsets = [0, 96], sizes = [2, 32], strides = [1, 1]} : vector<2x128xf32> to vector<2x32xf32>
    %cst_65 = arith.constant 5.000000e-01 : f32
    %154 = vector.broadcast %cst_65 : f32 to vector<2x32xf32>
    %155 = arith.mulf %154, %153 : vector<2x32xf32>
    %156 = math.tanh %155 : vector<2x32xf32>
    %cst_66 = arith.constant 1.000000e+00 : f32
    %157 = vector.broadcast %cst_66 : f32 to vector<2x32xf32>
    %158 = arith.addf %156, %157 : vector<2x32xf32>
    %cst_67 = arith.constant 5.000000e-01 : f32
    %159 = vector.broadcast %cst_67 : f32 to vector<2x32xf32>
    %160 = arith.mulf %159, %158 : vector<2x32xf32>
    %161 = arith.mulf %150, %122 : vector<2x32xf32>
    %162 = arith.mulf %142, %152 : vector<2x32xf32>
    %163 = arith.addf %161, %162 : vector<2x32xf32>
    %164 = math.tanh %163 : vector<2x32xf32>
    %165 = arith.mulf %160, %164 : vector<2x32xf32>
    %c0_68 = arith.constant 0 : index
    %c3_69 = arith.constant 3 : index
    %c0_70 = arith.constant 0 : index
    %166 = vector.load %arg4[%c0_68, %c3_69, %c0_70] : memref<2x8x32xf32, #tpu.memory_space<vmem>>, vector<2x1x32xf32>
    %167 = vector.shape_cast %166 : vector<2x1x32xf32> to vector<2x32xf32>
    %168 = vector.shape_cast %165 : vector<2x32xf32> to vector<2x1x32xf32>
    tpu.vector_store %arg4[%c0_68, %c3_69, %c0_70], %168 {strides = array<i32>} : memref<2x8x32xf32, #tpu.memory_space<vmem>>, vector<2x1x32xf32>,
    %c0_71 = arith.constant 0 : index
    %c4 = arith.constant 4 : index
    %c0_72 = arith.constant 0 : index
    %169 = vector.load %arg0[%c0_71, %c4, %c0_72] : memref<2x8x16xf32, #tpu.memory_space<vmem>>, vector<2x1x16xf32>
    %170 = vector.shape_cast %169 : vector<2x1x16xf32> to vector<2x16xf32>
    %cst_73 = arith.constant dense<0.000000e+00> : vector<2x128xf32>
    %171 = tpu.matmul %170, %0, %cst_73 {dimension_numbers = #tpu.dot_dimension_numbers<[1], [0], [0], [1], [0, 0, 1, 1], [], []>} : vector<2x16xf32>, vector<16x128xf32>, vector<2x128xf32> -> vector<2x128xf32>
    %cst_74 = arith.constant dense<0.000000e+00> : vector<2x128xf32>
    %172 = tpu.matmul %165, %1, %cst_74 {dimension_numbers = #tpu.dot_dimension_numbers<[1], [0], [0], [1], [0, 0, 1, 1], [], []>} : vector<2x32xf32>, vector<32x128xf32>, vector<2x128xf32> -> vector<2x128xf32>
    %173 = arith.addf %171, %172 : vector<2x128xf32>
    %174 = vector.broadcast %2 : vector<1x128xf32> to vector<2x128xf32>
    %175 = arith.addf %173, %174 : vector<2x128xf32>
    %176 = vector.extract_strided_slice %175 {offsets = [0, 0], sizes = [2, 32], strides = [1, 1]} : vector<2x128xf32> to vector<2x32xf32>
    %cst_75 = arith.constant 5.000000e-01 : f32
    %177 = vector.broadcast %cst_75 : f32 to vector<2x32xf32>
    %178 = arith.mulf %177, %176 : vector<2x32xf32>
    %179 = math.tanh %178 : vector<2x32xf32>
    %cst_76 = arith.constant 1.000000e+00 : f32
    %180 = vector.broadcast %cst_76 : f32 to vector<2x32xf32>
    %181 = arith.addf %179, %180 : vector<2x32xf32>
    %cst_77 = arith.constant 5.000000e-01 : f32
    %182 = vector.broadcast %cst_77 : f32 to vector<2x32xf32>
    %183 = arith.mulf %182, %181 : vector<2x32xf32>
    %184 = vector.extract_strided_slice %175 {offsets = [0, 32], sizes = [2, 32], strides = [1, 1]} : vector<2x128xf32> to vector<2x32xf32>
    %cst_78 = arith.constant 5.000000e-01 : f32
    %185 = vector.broadcast %cst_78 : f32 to vector<2x32xf32>
    %186 = arith.mulf %185, %184 : vector<2x32xf32>
    %187 = math.tanh %186 : vector<2x32xf32>
    %cst_79 = arith.constant 1.000000e+00 : f32
    %188 = vector.broadcast %cst_79 : f32 to vector<2x32xf32>
    %189 = arith.addf %187, %188 : vector<2x32xf32>
    %cst_80 = arith.constant 5.000000e-01 : f32
    %190 = vector.broadcast %cst_80 : f32 to vector<2x32xf32>
    %191 = arith.mulf %190, %189 : vector<2x32xf32>
    %192 = vector.extract_strided_slice %175 {offsets = [0, 64], sizes = [2, 32], strides = [1, 1]} : vector<2x128xf32> to vector<2x32xf32>
    %193 = math.tanh %192 : vector<2x32xf32>
    %194 = vector.extract_strided_slice %175 {offsets = [0, 96], sizes = [2, 32], strides = [1, 1]} : vector<2x128xf32> to vector<2x32xf32>
    %cst_81 = arith.constant 5.000000e-01 : f32
    %195 = vector.broadcast %cst_81 : f32 to vector<2x32xf32>
    %196 = arith.mulf %195, %194 : vector<2x32xf32>
    %197 = math.tanh %196 : vector<2x32xf32>
    %cst_82 = arith.constant 1.000000e+00 : f32
    %198 = vector.broadcast %cst_82 : f32 to vector<2x32xf32>
    %199 = arith.addf %197, %198 : vector<2x32xf32>
    %cst_83 = arith.constant 5.000000e-01 : f32
    %200 = vector.broadcast %cst_83 : f32 to vector<2x32xf32>
    %201 = arith.mulf %200, %199 : vector<2x32xf32>
    %202 = arith.mulf %191, %163 : vector<2x32xf32>
    %203 = arith.mulf %183, %193 : vector<2x32xf32>
    %204 = arith.addf %202, %203 : vector<2x32xf32>
    %205 = math.tanh %204 : vector<2x32xf32>
    %206 = arith.mulf %201, %205 : vector<2x32xf32>
    %c0_84 = arith.constant 0 : index
    %c4_85 = arith.constant 4 : index
    %c0_86 = arith.constant 0 : index
    %207 = vector.load %arg4[%c0_84, %c4_85, %c0_86] : memref<2x8x32xf32, #tpu.memory_space<vmem>>, vector<2x1x32xf32>
    %208 = vector.shape_cast %207 : vector<2x1x32xf32> to vector<2x32xf32>
    %209 = vector.shape_cast %206 : vector<2x32xf32> to vector<2x1x32xf32>
    tpu.vector_store %arg4[%c0_84, %c4_85, %c0_86], %209 {strides = array<i32>} : memref<2x8x32xf32, #tpu.memory_space<vmem>>, vector<2x1x32xf32>,
    %c0_87 = arith.constant 0 : index
    %c5 = arith.constant 5 : index
    %c0_88 = arith.constant 0 : index
    %210 = vector.load %arg0[%c0_87, %c5, %c0_88] : memref<2x8x16xf32, #tpu.memory_space<vmem>>, vector<2x1x16xf32>
    %211 = vector.shape_cast %210 : vector<2x1x16xf32> to vector<2x16xf32>
    %cst_89 = arith.constant dense<0.000000e+00> : vector<2x128xf32>
    %212 = tpu.matmul %211, %0, %cst_89 {dimension_numbers = #tpu.dot_dimension_numbers<[1], [0], [0], [1], [0, 0, 1, 1], [], []>} : vector<2x16xf32>, vector<16x128xf32>, vector<2x128xf32> -> vector<2x128xf32>
    %cst_90 = arith.constant dense<0.000000e+00> : vector<2x128xf32>
    %213 = tpu.matmul %206, %1, %cst_90 {dimension_numbers = #tpu.dot_dimension_numbers<[1], [0], [0], [1], [0, 0, 1, 1], [], []>} : vector<2x32xf32>, vector<32x128xf32>, vector<2x128xf32> -> vector<2x128xf32>
    %214 = arith.addf %212, %213 : vector<2x128xf32>
    %215 = vector.broadcast %2 : vector<1x128xf32> to vector<2x128xf32>
    %216 = arith.addf %214, %215 : vector<2x128xf32>
    %217 = vector.extract_strided_slice %216 {offsets = [0, 0], sizes = [2, 32], strides = [1, 1]} : vector<2x128xf32> to vector<2x32xf32>
    %cst_91 = arith.constant 5.000000e-01 : f32
    %218 = vector.broadcast %cst_91 : f32 to vector<2x32xf32>
    %219 = arith.mulf %218, %217 : vector<2x32xf32>
    %220 = math.tanh %219 : vector<2x32xf32>
    %cst_92 = arith.constant 1.000000e+00 : f32
    %221 = vector.broadcast %cst_92 : f32 to vector<2x32xf32>
    %222 = arith.addf %220, %221 : vector<2x32xf32>
    %cst_93 = arith.constant 5.000000e-01 : f32
    %223 = vector.broadcast %cst_93 : f32 to vector<2x32xf32>
    %224 = arith.mulf %223, %222 : vector<2x32xf32>
    %225 = vector.extract_strided_slice %216 {offsets = [0, 32], sizes = [2, 32], strides = [1, 1]} : vector<2x128xf32> to vector<2x32xf32>
    %cst_94 = arith.constant 5.000000e-01 : f32
    %226 = vector.broadcast %cst_94 : f32 to vector<2x32xf32>
    %227 = arith.mulf %226, %225 : vector<2x32xf32>
    %228 = math.tanh %227 : vector<2x32xf32>
    %cst_95 = arith.constant 1.000000e+00 : f32
    %229 = vector.broadcast %cst_95 : f32 to vector<2x32xf32>
    %230 = arith.addf %228, %229 : vector<2x32xf32>
    %cst_96 = arith.constant 5.000000e-01 : f32
    %231 = vector.broadcast %cst_96 : f32 to vector<2x32xf32>
    %232 = arith.mulf %231, %230 : vector<2x32xf32>
    %233 = vector.extract_strided_slice %216 {offsets = [0, 64], sizes = [2, 32], strides = [1, 1]} : vector<2x128xf32> to vector<2x32xf32>
    %234 = math.tanh %233 : vector<2x32xf32>
    %235 = vector.extract_strided_slice %216 {offsets = [0, 96], sizes = [2, 32], strides = [1, 1]} : vector<2x128xf32> to vector<2x32xf32>
    %cst_97 = arith.constant 5.000000e-01 : f32
    %236 = vector.broadcast %cst_97 : f32 to vector<2x32xf32>
    %237 = arith.mulf %236, %235 : vector<2x32xf32>
    %238 = math.tanh %237 : vector<2x32xf32>
    %cst_98 = arith.constant 1.000000e+00 : f32
    %239 = vector.broadcast %cst_98 : f32 to vector<2x32xf32>
    %240 = arith.addf %238, %239 : vector<2x32xf32>
    %cst_99 = arith.constant 5.000000e-01 : f32
    %241 = vector.broadcast %cst_99 : f32 to vector<2x32xf32>
    %242 = arith.mulf %241, %240 : vector<2x32xf32>
    %243 = arith.mulf %232, %204 : vector<2x32xf32>
    %244 = arith.mulf %224, %234 : vector<2x32xf32>
    %245 = arith.addf %243, %244 : vector<2x32xf32>
    %246 = math.tanh %245 : vector<2x32xf32>
    %247 = arith.mulf %242, %246 : vector<2x32xf32>
    %c0_100 = arith.constant 0 : index
    %c5_101 = arith.constant 5 : index
    %c0_102 = arith.constant 0 : index
    %248 = vector.load %arg4[%c0_100, %c5_101, %c0_102] : memref<2x8x32xf32, #tpu.memory_space<vmem>>, vector<2x1x32xf32>
    %249 = vector.shape_cast %248 : vector<2x1x32xf32> to vector<2x32xf32>
    %250 = vector.shape_cast %247 : vector<2x32xf32> to vector<2x1x32xf32>
    tpu.vector_store %arg4[%c0_100, %c5_101, %c0_102], %250 {strides = array<i32>} : memref<2x8x32xf32, #tpu.memory_space<vmem>>, vector<2x1x32xf32>,
    %c0_103 = arith.constant 0 : index
    %c6 = arith.constant 6 : index
    %c0_104 = arith.constant 0 : index
    %251 = vector.load %arg0[%c0_103, %c6, %c0_104] : memref<2x8x16xf32, #tpu.memory_space<vmem>>, vector<2x1x16xf32>
    %252 = vector.shape_cast %251 : vector<2x1x16xf32> to vector<2x16xf32>
    %cst_105 = arith.constant dense<0.000000e+00> : vector<2x128xf32>
    %253 = tpu.matmul %252, %0, %cst_105 {dimension_numbers = #tpu.dot_dimension_numbers<[1], [0], [0], [1], [0, 0, 1, 1], [], []>} : vector<2x16xf32>, vector<16x128xf32>, vector<2x128xf32> -> vector<2x128xf32>
    %cst_106 = arith.constant dense<0.000000e+00> : vector<2x128xf32>
    %254 = tpu.matmul %247, %1, %cst_106 {dimension_numbers = #tpu.dot_dimension_numbers<[1], [0], [0], [1], [0, 0, 1, 1], [], []>} : vector<2x32xf32>, vector<32x128xf32>, vector<2x128xf32> -> vector<2x128xf32>
    %255 = arith.addf %253, %254 : vector<2x128xf32>
    %256 = vector.broadcast %2 : vector<1x128xf32> to vector<2x128xf32>
    %257 = arith.addf %255, %256 : vector<2x128xf32>
    %258 = vector.extract_strided_slice %257 {offsets = [0, 0], sizes = [2, 32], strides = [1, 1]} : vector<2x128xf32> to vector<2x32xf32>
    %cst_107 = arith.constant 5.000000e-01 : f32
    %259 = vector.broadcast %cst_107 : f32 to vector<2x32xf32>
    %260 = arith.mulf %259, %258 : vector<2x32xf32>
    %261 = math.tanh %260 : vector<2x32xf32>
    %cst_108 = arith.constant 1.000000e+00 : f32
    %262 = vector.broadcast %cst_108 : f32 to vector<2x32xf32>
    %263 = arith.addf %261, %262 : vector<2x32xf32>
    %cst_109 = arith.constant 5.000000e-01 : f32
    %264 = vector.broadcast %cst_109 : f32 to vector<2x32xf32>
    %265 = arith.mulf %264, %263 : vector<2x32xf32>
    %266 = vector.extract_strided_slice %257 {offsets = [0, 32], sizes = [2, 32], strides = [1, 1]} : vector<2x128xf32> to vector<2x32xf32>
    %cst_110 = arith.constant 5.000000e-01 : f32
    %267 = vector.broadcast %cst_110 : f32 to vector<2x32xf32>
    %268 = arith.mulf %267, %266 : vector<2x32xf32>
    %269 = math.tanh %268 : vector<2x32xf32>
    %cst_111 = arith.constant 1.000000e+00 : f32
    %270 = vector.broadcast %cst_111 : f32 to vector<2x32xf32>
    %271 = arith.addf %269, %270 : vector<2x32xf32>
    %cst_112 = arith.constant 5.000000e-01 : f32
    %272 = vector.broadcast %cst_112 : f32 to vector<2x32xf32>
    %273 = arith.mulf %272, %271 : vector<2x32xf32>
    %274 = vector.extract_strided_slice %257 {offsets = [0, 64], sizes = [2, 32], strides = [1, 1]} : vector<2x128xf32> to vector<2x32xf32>
    %275 = math.tanh %274 : vector<2x32xf32>
    %276 = vector.extract_strided_slice %257 {offsets = [0, 96], sizes = [2, 32], strides = [1, 1]} : vector<2x128xf32> to vector<2x32xf32>
    %cst_113 = arith.constant 5.000000e-01 : f32
    %277 = vector.broadcast %cst_113 : f32 to vector<2x32xf32>
    %278 = arith.mulf %277, %276 : vector<2x32xf32>
    %279 = math.tanh %278 : vector<2x32xf32>
    %cst_114 = arith.constant 1.000000e+00 : f32
    %280 = vector.broadcast %cst_114 : f32 to vector<2x32xf32>
    %281 = arith.addf %279, %280 : vector<2x32xf32>
    %cst_115 = arith.constant 5.000000e-01 : f32
    %282 = vector.broadcast %cst_115 : f32 to vector<2x32xf32>
    %283 = arith.mulf %282, %281 : vector<2x32xf32>
    %284 = arith.mulf %273, %245 : vector<2x32xf32>
    %285 = arith.mulf %265, %275 : vector<2x32xf32>
    %286 = arith.addf %284, %285 : vector<2x32xf32>
    %287 = math.tanh %286 : vector<2x32xf32>
    %288 = arith.mulf %283, %287 : vector<2x32xf32>
    %c0_116 = arith.constant 0 : index
    %c6_117 = arith.constant 6 : index
    %c0_118 = arith.constant 0 : index
    %289 = vector.load %arg4[%c0_116, %c6_117, %c0_118] : memref<2x8x32xf32, #tpu.memory_space<vmem>>, vector<2x1x32xf32>
    %290 = vector.shape_cast %289 : vector<2x1x32xf32> to vector<2x32xf32>
    %291 = vector.shape_cast %288 : vector<2x32xf32> to vector<2x1x32xf32>
    tpu.vector_store %arg4[%c0_116, %c6_117, %c0_118], %291 {strides = array<i32>} : memref<2x8x32xf32, #tpu.memory_space<vmem>>, vector<2x1x32xf32>,
    %c0_119 = arith.constant 0 : index
    %c7 = arith.constant 7 : index
    %c0_120 = arith.constant 0 : index
    %292 = vector.load %arg0[%c0_119, %c7, %c0_120] : memref<2x8x16xf32, #tpu.memory_space<vmem>>, vector<2x1x16xf32>
    %293 = vector.shape_cast %292 : vector<2x1x16xf32> to vector<2x16xf32>
    %cst_121 = arith.constant dense<0.000000e+00> : vector<2x128xf32>
    %294 = tpu.matmul %293, %0, %cst_121 {dimension_numbers = #tpu.dot_dimension_numbers<[1], [0], [0], [1], [0, 0, 1, 1], [], []>} : vector<2x16xf32>, vector<16x128xf32>, vector<2x128xf32> -> vector<2x128xf32>
    %cst_122 = arith.constant dense<0.000000e+00> : vector<2x128xf32>
    %295 = tpu.matmul %288, %1, %cst_122 {dimension_numbers = #tpu.dot_dimension_numbers<[1], [0], [0], [1], [0, 0, 1, 1], [], []>} : vector<2x32xf32>, vector<32x128xf32>, vector<2x128xf32> -> vector<2x128xf32>
    %296 = arith.addf %294, %295 : vector<2x128xf32>
    %297 = vector.broadcast %2 : vector<1x128xf32> to vector<2x128xf32>
    %298 = arith.addf %296, %297 : vector<2x128xf32>
    %299 = vector.extract_strided_slice %298 {offsets = [0, 0], sizes = [2, 32], strides = [1, 1]} : vector<2x128xf32> to vector<2x32xf32>
    %cst_123 = arith.constant 5.000000e-01 : f32
    %300 = vector.broadcast %cst_123 : f32 to vector<2x32xf32>
    %301 = arith.mulf %300, %299 : vector<2x32xf32>
    %302 = math.tanh %301 : vector<2x32xf32>
    %cst_124 = arith.constant 1.000000e+00 : f32
    %303 = vector.broadcast %cst_124 : f32 to vector<2x32xf32>
    %304 = arith.addf %302, %303 : vector<2x32xf32>
    %cst_125 = arith.constant 5.000000e-01 : f32
    %305 = vector.broadcast %cst_125 : f32 to vector<2x32xf32>
    %306 = arith.mulf %305, %304 : vector<2x32xf32>
    %307 = vector.extract_strided_slice %298 {offsets = [0, 32], sizes = [2, 32], strides = [1, 1]} : vector<2x128xf32> to vector<2x32xf32>
    %cst_126 = arith.constant 5.000000e-01 : f32
    %308 = vector.broadcast %cst_126 : f32 to vector<2x32xf32>
    %309 = arith.mulf %308, %307 : vector<2x32xf32>
    %310 = math.tanh %309 : vector<2x32xf32>
    %cst_127 = arith.constant 1.000000e+00 : f32
    %311 = vector.broadcast %cst_127 : f32 to vector<2x32xf32>
    %312 = arith.addf %310, %311 : vector<2x32xf32>
    %cst_128 = arith.constant 5.000000e-01 : f32
    %313 = vector.broadcast %cst_128 : f32 to vector<2x32xf32>
    %314 = arith.mulf %313, %312 : vector<2x32xf32>
    %315 = vector.extract_strided_slice %298 {offsets = [0, 64], sizes = [2, 32], strides = [1, 1]} : vector<2x128xf32> to vector<2x32xf32>
    %316 = math.tanh %315 : vector<2x32xf32>
    %317 = vector.extract_strided_slice %298 {offsets = [0, 96], sizes = [2, 32], strides = [1, 1]} : vector<2x128xf32> to vector<2x32xf32>
    %cst_129 = arith.constant 5.000000e-01 : f32
    %318 = vector.broadcast %cst_129 : f32 to vector<2x32xf32>
    %319 = arith.mulf %318, %317 : vector<2x32xf32>
    %320 = math.tanh %319 : vector<2x32xf32>
    %cst_130 = arith.constant 1.000000e+00 : f32
    %321 = vector.broadcast %cst_130 : f32 to vector<2x32xf32>
    %322 = arith.addf %320, %321 : vector<2x32xf32>
    %cst_131 = arith.constant 5.000000e-01 : f32
    %323 = vector.broadcast %cst_131 : f32 to vector<2x32xf32>
    %324 = arith.mulf %323, %322 : vector<2x32xf32>
    %325 = arith.mulf %314, %286 : vector<2x32xf32>
    %326 = arith.mulf %306, %316 : vector<2x32xf32>
    %327 = arith.addf %325, %326 : vector<2x32xf32>
    %328 = math.tanh %327 : vector<2x32xf32>
    %329 = arith.mulf %324, %328 : vector<2x32xf32>
    %c0_132 = arith.constant 0 : index
    %c7_133 = arith.constant 7 : index
    %c0_134 = arith.constant 0 : index
    %330 = vector.load %arg4[%c0_132, %c7_133, %c0_134] : memref<2x8x32xf32, #tpu.memory_space<vmem>>, vector<2x1x32xf32>
    %331 = vector.shape_cast %330 : vector<2x1x32xf32> to vector<2x32xf32>
    %332 = vector.shape_cast %329 : vector<2x32xf32> to vector<2x1x32xf32>
    tpu.vector_store %arg4[%c0_132, %c7_133, %c0_134], %332 {strides = array<i32>} : memref<2x8x32xf32, #tpu.memory_space<vmem>>, vector<2x1x32xf32>,
    %c0_135 = arith.constant 0 : index
    %c0_136 = arith.constant 0 : index
    %333 = vector.load %arg5[%c0_135, %c0_136] : memref<2x32xf32, #tpu.memory_space<vmem>>, vector<2x32xf32>
    tpu.vector_store %arg5[%c0_135, %c0_136], %329 {strides = array<i32>} : memref<2x32xf32, #tpu.memory_space<vmem>>, vector<2x32xf32>,
    %c0_137 = arith.constant 0 : index
    %c0_138 = arith.constant 0 : index
    %334 = vector.load %arg6[%c0_137, %c0_138] : memref<2x32xf32, #tpu.memory_space<vmem>>, vector<2x32xf32>
    tpu.vector_store %arg6[%c0_137, %c0_138], %327 {strides = array<i32>} : memref<2x32xf32, #tpu.memory_space<vmem>>, vector<2x32xf32>,
    return
  }
}

module attributes {stable_mosaic.version = 11 : i64} {
  func.func @decoder_fused_kernel(%arg0: i32, %arg1: memref<1x2x16xf32, #tpu.memory_space<vmem>>, %arg2: memref<2x8x32xf32, #tpu.memory_space<vmem>>, %arg3: memref<2x8xf32, #tpu.memory_space<vmem>>, %arg4: memref<2x32xf32, #tpu.memory_space<vmem>>, %arg5: memref<2x32xf32, #tpu.memory_space<vmem>>, %arg6: memref<32x32xf32, #tpu.memory_space<vmem>>, %arg7: memref<16x128xf32, #tpu.memory_space<vmem>>, %arg8: memref<32x128xf32, #tpu.memory_space<vmem>>, %arg9: memref<32x128xf32, #tpu.memory_space<vmem>>, %arg10: memref<1x128xf32, #tpu.memory_space<vmem>>, %arg11: memref<32x128xf32, #tpu.memory_space<vmem>>, %arg12: memref<32x128xf32, #tpu.memory_space<vmem>>, %arg13: memref<1x128xf32, #tpu.memory_space<vmem>>, %arg14: memref<1x2x128xf32, #tpu.memory_space<vmem>>, %arg15: memref<2x32xf32, #tpu.memory_space<vmem>>, %arg16: memref<2x32xf32, #tpu.memory_space<vmem>>) attributes {dimension_semantics = [#tpu.dimension_semantics<arbitrary>], iteration_bounds = array<i64: 5>, scalar_prefetch = 0 : i64, scratch_operands = 2 : i64, tpu.core_type = #tpu.core_type<tc>, window_params = [{transform_indices = @transform_0, window_bounds = array<i64: 1, 2, 16>}, {pipeline_mode = #tpu.pipeline_mode<synchronous>, transform_indices = @transform_1, window_bounds = array<i64: 2, 8, 32>}, {pipeline_mode = #tpu.pipeline_mode<synchronous>, transform_indices = @transform_2, window_bounds = array<i64: 2, 8>}, {pipeline_mode = #tpu.pipeline_mode<synchronous>, transform_indices = @transform_3, window_bounds = array<i64: 2, 32>}, {pipeline_mode = #tpu.pipeline_mode<synchronous>, transform_indices = @transform_4, window_bounds = array<i64: 2, 32>}, {pipeline_mode = #tpu.pipeline_mode<synchronous>, transform_indices = @transform_5, window_bounds = array<i64: 32, 32>}, {pipeline_mode = #tpu.pipeline_mode<synchronous>, transform_indices = @transform_6, window_bounds = array<i64: 16, 128>}, {pipeline_mode = #tpu.pipeline_mode<synchronous>, transform_indices = @transform_7, window_bounds = array<i64: 32, 128>}, {pipeline_mode = #tpu.pipeline_mode<synchronous>, transform_indices = @transform_8, window_bounds = array<i64: 32, 128>}, {pipeline_mode = #tpu.pipeline_mode<synchronous>, transform_indices = @transform_9, window_bounds = array<i64: 1, 128>}, {pipeline_mode = #tpu.pipeline_mode<synchronous>, transform_indices = @transform_10, window_bounds = array<i64: 32, 128>}, {pipeline_mode = #tpu.pipeline_mode<synchronous>, transform_indices = @transform_11, window_bounds = array<i64: 32, 128>}, {pipeline_mode = #tpu.pipeline_mode<synchronous>, transform_indices = @transform_12, window_bounds = array<i64: 1, 128>}, {transform_indices = @transform_13, window_bounds = array<i64: 1, 2, 128>}]} {
    %c0_i32 = arith.constant 0 : i32
    %0 = arith.cmpi eq, %arg0, %c0_i32 : i32
    %1 = arith.extui %0 : i1 to i32
    %c0_i32_0 = arith.constant 0 : i32
    %2 = arith.cmpi ne, %1, %c0_i32_0 : i32
    scf.if %2 {
      %c0_55 = arith.constant 0 : index
      %c0_56 = arith.constant 0 : index
      %85 = vector.load %arg4[%c0_55, %c0_56] : memref<2x32xf32, #tpu.memory_space<vmem>>, vector<2x32xf32>
      %c0_57 = arith.constant 0 : index
      %c0_58 = arith.constant 0 : index
      %86 = vector.load %arg15[%c0_57, %c0_58] : memref<2x32xf32, #tpu.memory_space<vmem>>, vector<2x32xf32>
      tpu.vector_store %arg15[%c0_57, %c0_58], %85 {strides = array<i32>} : memref<2x32xf32, #tpu.memory_space<vmem>>, vector<2x32xf32>,
      %c0_59 = arith.constant 0 : index
      %c0_60 = arith.constant 0 : index
      %87 = vector.load %arg5[%c0_59, %c0_60] : memref<2x32xf32, #tpu.memory_space<vmem>>, vector<2x32xf32>
      %c0_61 = arith.constant 0 : index
      %c0_62 = arith.constant 0 : index
      %88 = vector.load %arg16[%c0_61, %c0_62] : memref<2x32xf32, #tpu.memory_space<vmem>>, vector<2x32xf32>
      tpu.vector_store %arg16[%c0_61, %c0_62], %87 {strides = array<i32>} : memref<2x32xf32, #tpu.memory_space<vmem>>, vector<2x32xf32>,
    } else {
    }
    %c0 = arith.constant 0 : index
    %c0_1 = arith.constant 0 : index
    %c0_2 = arith.constant 0 : index
    %3 = vector.load %arg1[%c0, %c0_1, %c0_2] : memref<1x2x16xf32, #tpu.memory_space<vmem>>, vector<1x2x16xf32>
    %4 = vector.shape_cast %3 : vector<1x2x16xf32> to vector<2x16xf32>
    %c0_3 = arith.constant 0 : index
    %c0_4 = arith.constant 0 : index
    %5 = vector.load %arg15[%c0_3, %c0_4] : memref<2x32xf32, #tpu.memory_space<vmem>>, vector<2x32xf32>
    %c0_5 = arith.constant 0 : index
    %c0_6 = arith.constant 0 : index
    %6 = vector.load %arg16[%c0_5, %c0_6] : memref<2x32xf32, #tpu.memory_space<vmem>>, vector<2x32xf32>
    %c0_7 = arith.constant 0 : index
    %c0_8 = arith.constant 0 : index
    %c0_9 = arith.constant 0 : index
    %7 = vector.load %arg2[%c0_7, %c0_8, %c0_9] : memref<2x8x32xf32, #tpu.memory_space<vmem>>, vector<2x8x32xf32>
    %c0_10 = arith.constant 0 : index
    %c0_11 = arith.constant 0 : index
    %8 = vector.load %arg3[%c0_10, %c0_11] : memref<2x8xf32, #tpu.memory_space<vmem>>, vector<2x8xf32>
    %c0_12 = arith.constant 0 : index
    %c0_13 = arith.constant 0 : index
    %9 = vector.load %arg6[%c0_12, %c0_13] : memref<32x32xf32, #tpu.memory_space<vmem>>, vector<32x32xf32>
    %cst = arith.constant dense<0.000000e+00> : vector<2x32xf32>
    %10 = tpu.matmul %5, %9, %cst {dimension_numbers = #tpu.dot_dimension_numbers<[1], [0], [0], [1], [0, 0, 1, 1], [], []>} : vector<2x32xf32>, vector<32x32xf32>, vector<2x32xf32> -> vector<2x32xf32>
    %11 = vector.shape_cast %10 : vector<2x32xf32> to vector<2x1x32xf32>
    "tpu.trace_start"() <{level = 10 : i32, message = "bqh,bsh->bqs"}> : () -> ()
    %cst_14 = arith.constant dense<0.000000e+00> : vector<2x1x8xf32>
    %12 = tpu.matmul %11, %7, %cst_14 {dimension_numbers = #tpu.dot_dimension_numbers<[2], [2], [1], [1], [0, 0, 0, 1, 1, 1], [0], [0]>} : vector<2x1x32xf32>, vector<2x8x32xf32>, vector<2x1x8xf32> -> vector<2x1x8xf32>
    "tpu.trace_stop"() : () -> ()
    %13 = vector.shape_cast %8 : vector<2x8xf32> to vector<2x1x8xf32>
    %cst_15 = arith.constant 5.000000e-01 : f32
    %14 = vector.broadcast %cst_15 : f32 to vector<2x1x8xf32>
    %15 = arith.cmpf ogt, %13, %14 : vector<2x1x8xf32>
    %cst_16 = arith.constant -1.000000e+09 : f32
    %16 = vector.broadcast %cst_16 : f32 to vector<2x1x8xf32>
    %17 = arith.select %15, %12, %16 : vector<2x1x8xi1>, vector<2x1x8xf32>
    %cst_17 = arith.constant dense<0xFF800000> : vector<2x1xf32>
    %18 = vector.multi_reduction <maximumf>, %17, %cst_17 [2] : vector<2x1x8xf32> to vector<2x1xf32>
    %19 = vector.shape_cast %18 : vector<2x1xf32> to vector<2x1x1xf32>
    %20 = vector.broadcast %19 : vector<2x1x1xf32> to vector<2x1x8xf32>
    %21 = arith.subf %17, %20 : vector<2x1x8xf32>
    %22 = math.exp %21 : vector<2x1x8xf32>
    %cst_18 = arith.constant dense<0.000000e+00> : vector<2x1xf32>
    %23 = vector.multi_reduction <add>, %22, %cst_18 [2] : vector<2x1x8xf32> to vector<2x1xf32>
    %24 = vector.shape_cast %23 : vector<2x1xf32> to vector<2x1x1xf32>
    %25 = tpu.reciprocal %24 {approx = true} : vector<2x1x1xf32> -> vector<2x1x1xf32>
    %26 = vector.broadcast %25 : vector<2x1x1xf32> to vector<2x1x8xf32>
    %27 = arith.mulf %22, %26 : vector<2x1x8xf32>
    "tpu.trace_start"() <{level = 10 : i32, message = "bqs,bsh->bqh"}> : () -> ()
    %cst_19 = arith.constant dense<0.000000e+00> : vector<2x1x32xf32>
    %28 = tpu.matmul %27, %7, %cst_19 {dimension_numbers = #tpu.dot_dimension_numbers<[2], [1], [1], [2], [0, 0, 0, 1, 1, 2], [0], [0]>} : vector<2x1x8xf32>, vector<2x8x32xf32>, vector<2x1x32xf32> -> vector<2x1x32xf32>
    "tpu.trace_stop"() : () -> ()
    %29 = vector.shape_cast %28 : vector<2x1x32xf32> to vector<2x32xf32>
    %c0_20 = arith.constant 0 : index
    %c0_21 = arith.constant 0 : index
    %30 = vector.load %arg7[%c0_20, %c0_21] : memref<16x128xf32, #tpu.memory_space<vmem>>, vector<16x128xf32>
    %cst_22 = arith.constant dense<0.000000e+00> : vector<2x128xf32>
    %31 = tpu.matmul %4, %30, %cst_22 {dimension_numbers = #tpu.dot_dimension_numbers<[1], [0], [0], [1], [0, 0, 1, 1], [], []>} : vector<2x16xf32>, vector<16x128xf32>, vector<2x128xf32> -> vector<2x128xf32>
    %c0_23 = arith.constant 0 : index
    %c0_24 = arith.constant 0 : index
    %32 = vector.load %arg8[%c0_23, %c0_24] : memref<32x128xf32, #tpu.memory_space<vmem>>, vector<32x128xf32>
    %cst_25 = arith.constant dense<0.000000e+00> : vector<2x128xf32>
    %33 = tpu.matmul %29, %32, %cst_25 {dimension_numbers = #tpu.dot_dimension_numbers<[1], [0], [0], [1], [0, 0, 1, 1], [], []>} : vector<2x32xf32>, vector<32x128xf32>, vector<2x128xf32> -> vector<2x128xf32>
    %34 = arith.addf %31, %33 : vector<2x128xf32>
    %c0_26 = arith.constant 0 : index
    %c0_27 = arith.constant 0 : index
    %35 = vector.load %arg9[%c0_26, %c0_27] : memref<32x128xf32, #tpu.memory_space<vmem>>, vector<32x128xf32>
    %cst_28 = arith.constant dense<0.000000e+00> : vector<2x128xf32>
    %36 = tpu.matmul %5, %35, %cst_28 {dimension_numbers = #tpu.dot_dimension_numbers<[1], [0], [0], [1], [0, 0, 1, 1], [], []>} : vector<2x32xf32>, vector<32x128xf32>, vector<2x128xf32> -> vector<2x128xf32>
    %37 = arith.addf %34, %36 : vector<2x128xf32>
    %c0_29 = arith.constant 0 : index
    %c0_30 = arith.constant 0 : index
    %38 = vector.load %arg10[%c0_29, %c0_30] : memref<1x128xf32, #tpu.memory_space<vmem>>, vector<1x128xf32>
    %39 = vector.broadcast %38 : vector<1x128xf32> to vector<2x128xf32>
    %40 = arith.addf %37, %39 : vector<2x128xf32>
    %41 = vector.extract_strided_slice %40 {offsets = [0, 0], sizes = [2, 32], strides = [1, 1]} : vector<2x128xf32> to vector<2x32xf32>
    %cst_31 = arith.constant 5.000000e-01 : f32
    %42 = vector.broadcast %cst_31 : f32 to vector<2x32xf32>
    %43 = arith.mulf %42, %41 : vector<2x32xf32>
    %44 = math.tanh %43 : vector<2x32xf32>
    %cst_32 = arith.constant 1.000000e+00 : f32
    %45 = vector.broadcast %cst_32 : f32 to vector<2x32xf32>
    %46 = arith.addf %44, %45 : vector<2x32xf32>
    %cst_33 = arith.constant 5.000000e-01 : f32
    %47 = vector.broadcast %cst_33 : f32 to vector<2x32xf32>
    %48 = arith.mulf %47, %46 : vector<2x32xf32>
    %49 = vector.extract_strided_slice %40 {offsets = [0, 32], sizes = [2, 32], strides = [1, 1]} : vector<2x128xf32> to vector<2x32xf32>
    %cst_34 = arith.constant 5.000000e-01 : f32
    %50 = vector.broadcast %cst_34 : f32 to vector<2x32xf32>
    %51 = arith.mulf %50, %49 : vector<2x32xf32>
    %52 = math.tanh %51 : vector<2x32xf32>
    %cst_35 = arith.constant 1.000000e+00 : f32
    %53 = vector.broadcast %cst_35 : f32 to vector<2x32xf32>
    %54 = arith.addf %52, %53 : vector<2x32xf32>
    %cst_36 = arith.constant 5.000000e-01 : f32
    %55 = vector.broadcast %cst_36 : f32 to vector<2x32xf32>
    %56 = arith.mulf %55, %54 : vector<2x32xf32>
    %57 = vector.extract_strided_slice %40 {offsets = [0, 64], sizes = [2, 32], strides = [1, 1]} : vector<2x128xf32> to vector<2x32xf32>
    %58 = math.tanh %57 : vector<2x32xf32>
    %59 = vector.extract_strided_slice %40 {offsets = [0, 96], sizes = [2, 32], strides = [1, 1]} : vector<2x128xf32> to vector<2x32xf32>
    %cst_37 = arith.constant 5.000000e-01 : f32
    %60 = vector.broadcast %cst_37 : f32 to vector<2x32xf32>
    %61 = arith.mulf %60, %59 : vector<2x32xf32>
    %62 = math.tanh %61 : vector<2x32xf32>
    %cst_38 = arith.constant 1.000000e+00 : f32
    %63 = vector.broadcast %cst_38 : f32 to vector<2x32xf32>
    %64 = arith.addf %62, %63 : vector<2x32xf32>
    %cst_39 = arith.constant 5.000000e-01 : f32
    %65 = vector.broadcast %cst_39 : f32 to vector<2x32xf32>
    %66 = arith.mulf %65, %64 : vector<2x32xf32>
    %67 = arith.mulf %56, %6 : vector<2x32xf32>
    %68 = arith.mulf %48, %58 : vector<2x32xf32>
    %69 = arith.addf %67, %68 : vector<2x32xf32>
    %70 = math.tanh %69 : vector<2x32xf32>
    %71 = arith.mulf %66, %70 : vector<2x32xf32>
    %c0_40 = arith.constant 0 : index
    %c0_41 = arith.constant 0 : index
    %72 = vector.load %arg15[%c0_40, %c0_41] : memref<2x32xf32, #tpu.memory_space<vmem>>, vector<2x32xf32>
    tpu.vector_store %arg15[%c0_40, %c0_41], %71 {strides = array<i32>} : memref<2x32xf32, #tpu.memory_space<vmem>>, vector<2x32xf32>,
    %c0_42 = arith.constant 0 : index
    %c0_43 = arith.constant 0 : index
    %73 = vector.load %arg16[%c0_42, %c0_43] : memref<2x32xf32, #tpu.memory_space<vmem>>, vector<2x32xf32>
    tpu.vector_store %arg16[%c0_42, %c0_43], %69 {strides = array<i32>} : memref<2x32xf32, #tpu.memory_space<vmem>>, vector<2x32xf32>,
    %c0_44 = arith.constant 0 : index
    %c0_45 = arith.constant 0 : index
    %74 = vector.load %arg11[%c0_44, %c0_45] : memref<32x128xf32, #tpu.memory_space<vmem>>, vector<32x128xf32>
    %cst_46 = arith.constant dense<0.000000e+00> : vector<2x128xf32>
    %75 = tpu.matmul %71, %74, %cst_46 {dimension_numbers = #tpu.dot_dimension_numbers<[1], [0], [0], [1], [0, 0, 1, 1], [], []>} : vector<2x32xf32>, vector<32x128xf32>, vector<2x128xf32> -> vector<2x128xf32>
    %c0_47 = arith.constant 0 : index
    %c0_48 = arith.constant 0 : index
    %76 = vector.load %arg12[%c0_47, %c0_48] : memref<32x128xf32, #tpu.memory_space<vmem>>, vector<32x128xf32>
    %cst_49 = arith.constant dense<0.000000e+00> : vector<2x128xf32>
    %77 = tpu.matmul %29, %76, %cst_49 {dimension_numbers = #tpu.dot_dimension_numbers<[1], [0], [0], [1], [0, 0, 1, 1], [], []>} : vector<2x32xf32>, vector<32x128xf32>, vector<2x128xf32> -> vector<2x128xf32>
    %78 = arith.addf %75, %77 : vector<2x128xf32>
    %c0_50 = arith.constant 0 : index
    %c0_51 = arith.constant 0 : index
    %79 = vector.load %arg13[%c0_50, %c0_51] : memref<1x128xf32, #tpu.memory_space<vmem>>, vector<1x128xf32>
    %80 = vector.broadcast %79 : vector<1x128xf32> to vector<2x128xf32>
    %81 = arith.addf %78, %80 : vector<2x128xf32>
    %c0_52 = arith.constant 0 : index
    %c0_53 = arith.constant 0 : index
    %c0_54 = arith.constant 0 : index
    %82 = vector.load %arg14[%c0_52, %c0_53, %c0_54] : memref<1x2x128xf32, #tpu.memory_space<vmem>>, vector<1x2x128xf32>
    %83 = vector.shape_cast %82 : vector<1x2x128xf32> to vector<2x128xf32>
    %84 = vector.shape_cast %81 : vector<2x128xf32> to vector<1x2x128xf32>
    tpu.vector_store %arg14[%c0_52, %c0_53, %c0_54], %84 {strides = array<i32>} : memref<1x2x128xf32, #tpu.memory_space<vmem>>, vector<1x2x128xf32>,
    return
  }
  func.func @transform_0(%arg0: i32) -> (i32, i32, i32) {
    %c0_i32 = arith.constant 0 : i32
    %c0_i32_0 = arith.constant 0 : i32
    %c0_i32_1 = arith.constant 0 : i32
    return %arg0, %c0_i32, %c0_i32_0 : i32, i32, i32
  }
  func.func @transform_1(%arg0: i32) -> (i32, i32, i32) {
    %c0_i32 = arith.constant 0 : i32
    %c0_i32_0 = arith.constant 0 : i32
    %c0_i32_1 = arith.constant 0 : i32
    %c0_i32_2 = arith.constant 0 : i32
    return %c0_i32, %c0_i32_0, %c0_i32_1 : i32, i32, i32
  }
  func.func @transform_2(%arg0: i32) -> (i32, i32) {
    %c0_i32 = arith.constant 0 : i32
    %c0_i32_0 = arith.constant 0 : i32
    %c0_i32_1 = arith.constant 0 : i32
    return %c0_i32, %c0_i32_0 : i32, i32
  }
  func.func @transform_3(%arg0: i32) -> (i32, i32) {
    %c0_i32 = arith.constant 0 : i32
    %c0_i32_0 = arith.constant 0 : i32
    %c0_i32_1 = arith.constant 0 : i32
    return %c0_i32, %c0_i32_0 : i32, i32
  }
  func.func @transform_4(%arg0: i32) -> (i32, i32) {
    %c0_i32 = arith.constant 0 : i32
    %c0_i32_0 = arith.constant 0 : i32
    %c0_i32_1 = arith.constant 0 : i32
    return %c0_i32, %c0_i32_0 : i32, i32
  }
  func.func @transform_5(%arg0: i32) -> (i32, i32) {
    %c0_i32 = arith.constant 0 : i32
    %c0_i32_0 = arith.constant 0 : i32
    %c0_i32_1 = arith.constant 0 : i32
    return %c0_i32, %c0_i32_0 : i32, i32
  }
  func.func @transform_6(%arg0: i32) -> (i32, i32) {
    %c0_i32 = arith.constant 0 : i32
    %c0_i32_0 = arith.constant 0 : i32
    %c0_i32_1 = arith.constant 0 : i32
    return %c0_i32, %c0_i32_0 : i32, i32
  }
  func.func @transform_7(%arg0: i32) -> (i32, i32) {
    %c0_i32 = arith.constant 0 : i32
    %c0_i32_0 = arith.constant 0 : i32
    %c0_i32_1 = arith.constant 0 : i32
    return %c0_i32, %c0_i32_0 : i32, i32
  }
  func.func @transform_8(%arg0: i32) -> (i32, i32) {
    %c0_i32 = arith.constant 0 : i32
    %c0_i32_0 = arith.constant 0 : i32
    %c0_i32_1 = arith.constant 0 : i32
    return %c0_i32, %c0_i32_0 : i32, i32
  }
  func.func @transform_9(%arg0: i32) -> (i32, i32) {
    %c0_i32 = arith.constant 0 : i32
    %c0_i32_0 = arith.constant 0 : i32
    %c0_i32_1 = arith.constant 0 : i32
    return %c0_i32, %c0_i32_0 : i32, i32
  }
  func.func @transform_10(%arg0: i32) -> (i32, i32) {
    %c0_i32 = arith.constant 0 : i32
    %c0_i32_0 = arith.constant 0 : i32
    %c0_i32_1 = arith.constant 0 : i32
    return %c0_i32, %c0_i32_0 : i32, i32
  }
  func.func @transform_11(%arg0: i32) -> (i32, i32) {
    %c0_i32 = arith.constant 0 : i32
    %c0_i32_0 = arith.constant 0 : i32
    %c0_i32_1 = arith.constant 0 : i32
    return %c0_i32, %c0_i32_0 : i32, i32
  }
  func.func @transform_12(%arg0: i32) -> (i32, i32) {
    %c0_i32 = arith.constant 0 : i32
    %c0_i32_0 = arith.constant 0 : i32
    %c0_i32_1 = arith.constant 0 : i32
    return %c0_i32, %c0_i32_0 : i32, i32
  }
  func.func @transform_13(%arg0: i32) -> (i32, i32, i32) {
    %c0_i32 = arith.constant 0 : i32
    %c0_i32_0 = arith.constant 0 : i32
    %c0_i32_1 = arith.constant 0 : i32
    return %arg0, %c0_i32, %c0_i32_0 : i32, i32, i32
  }
}

</mosaic_0001>

<llo_original>
// kernel: _forward_train.2
$region0: #{_forward_train.2}
  #allocation0 [shape = 'u32[]', space=smem, size = 0x4, offset = 0x4, fixed_abs, tag = 'smem constant byte address 0x4 - core index']
  #allocation1 [shape = 'u32[72,128]{1,0:T(1,128)}', space=vmem, size = 0x9000, scoped, tag = 'internal scratch']
  %s0 = inlined_call_operand.vmem [shape: f32[2,8,16], index: 0, kind: input, shape index: {}]
  %s1 = inlined_call_operand.vmem [shape: f32[16,128], index: 1, kind: input, shape index: {}]
  %s2 = inlined_call_operand.vmem [shape: f32[32,128], index: 2, kind: input, shape index: {}]
  %s3 = inlined_call_operand.vmem [shape: f32[1,128], index: 3, kind: input, shape index: {}]
  %s4 = inlined_call_operand.vmem [shape: f32[2,8,32], index: 4, kind: output, shape index: {0}]
  %s5 = inlined_call_operand.vmem [shape: f32[2,32], index: 5, kind: output, shape index: {1}]
  %s6 = inlined_call_operand.vmem [shape: f32[2,32], index: 6, kind: output, shape index: {2}]
  %7 = xla_tuple %s4, %s5, %s6
  %s8 = sld [smem:[#allocation0]]
  $region42: #{_forward_train.2} parent=0
    _
  %s10 = ssub.s32 1, %s8
  %s11 = scalar_select 0, %s10, %s8
  // Predicated region
  $region2: #{_forward_train.2} parent=0 // pred_check
    _
  $region3: #{_forward_train.2} parent=0 // pred_check_branch
    %13 = sbr.rel (0) target = $region5
  $region4: #{_forward_train.2} parent=0 // pred_region
    _
  $region5: #{_forward_train.2} parent=0 // pred_fallthru
    _
  // Predicated region
  $region6: #{_forward_train.2} parent=0 // pred_check
    _
  $region7: #{_forward_train.2} parent=0 // pred_check_branch
    %15 = sbr.rel (0) target = $region9
  $region8: #{_forward_train.2} parent=0 // pred_region
    _
  $region9: #{_forward_train.2} parent=0 // pred_fallthru
    _
  // Predicated region
  $region10: #{_forward_train.2} parent=0 // pred_check
    _
  $region11: #{_forward_train.2} parent=0 // pred_check_branch
    %17 = sbr.rel (0) target = $region13
  $region12: #{_forward_train.2} parent=0 // pred_region
    _
  $region13: #{_forward_train.2} parent=0 // pred_fallthru
    _
  // Predicated region
  $region14: #{_forward_train.2} parent=0 // pred_check
    _
  $region15: #{_forward_train.2} parent=0 // pred_check_branch
    %19 = sbr.rel (0) target = $region17
  $region16: #{_forward_train.2} parent=0 // pred_region
    _
  $region17: #{_forward_train.2} parent=0 // pred_fallthru
    _
  %v20 = vld [vmem:[%s1] sm:$0xff]
  %v21 = vld [vmem:[%s1 + $0x8] sm:$0xff]
  %v22 = vld [vmem:[%s2] sm:$0xff]
  %v23 = vld [vmem:[%s2 + $0x8] sm:$0xff]
  %v24 = vld [vmem:[%s2 + $0x10] sm:$0xff]
  %v25 = vld [vmem:[%s2 + $0x18] sm:$0xff]
  %v26 = vld [vmem:[%s3] sm:$0x1]
  %v27 = vld [vmem:[%s0] sm:$0x1]
  %v28 = vld [vmem:[%s0 + $0x8] sm:$0x1]
  %vm29 = vcmask 261120
  %v31 = vsel %vm29, 0.0, 0
  %33 = vmatpush.msra.mxu0 0.0
  %34 = vmatpush.msra.mxu0 0.0
  %35 = vmatpush.msra.mxu0 0.0
  %36 = vmatpush.msra.mxu0 0.0
  %37 = vmatpush.msra.mxu0 0.0
  %38 = vmatpush.msra.mxu0 0.0
  %39 = vmatpush.msra.mxu0 0.0
  %40 = vmatpush.msra.mxu0 0.0
  %41 = vmatpush.msra.mxu0 0.0
  %42 = vmatpush.msra.mxu0 0.0
  %43 = vmatpush.msra.mxu0 0.0
  %44 = vmatpush.msra.mxu0 0.0
  %45 = vmatpush.msra.mxu0 %v25
  %46 = vmatpush.msra.mxu0 %v24
  %47 = vmatpush.msra.mxu0 %v23
  %48 = vmatpush.msra.mxu0 %v22
  %49 = vmatmul.f32.gmra.mxu0 %v31
  %v50 = vpop.f32.mrf.mxu0
  %v51 = vadd.f32 0.0, %v50
  %52 = vdwg.mxu0
  %v55 = vrot.slane %v28, 7
  %vm56 = vcmask 1041409
  %v57 = vsel %vm56, %v55, %v27
  %vm58 = vcmask 130048
  %v59 = vsel %vm58, %v57, 0
  %61 = vmatpush.msra.mxu0 0.0
  %62 = vmatpush.msra.mxu0 0.0
  %63 = vmatpush.msra.mxu0 0.0
  %64 = vmatpush.msra.mxu0 0.0
  %65 = vmatpush.msra.mxu0 0.0
  %66 = vmatpush.msra.mxu0 0.0
  %67 = vmatpush.msra.mxu0 0.0
  %68 = vmatpush.msra.mxu0 0.0
  %69 = vmatpush.msra.mxu0 0.0
  %70 = vmatpush.msra.mxu0 0.0
  %71 = vmatpush.msra.mxu0 0.0
  %72 = vmatpush.msra.mxu0 0.0
  %73 = vmatpush.msra.mxu0 0.0
  %74 = vmatpush.msra.mxu0 0.0
  %75 = vmatpush.msra.mxu0 %v21
  %76 = vmatpush.msra.mxu0 %v20
  %77 = vmatmul.f32.gmra.mxu0 %v59
  %v78 = vpop.f32.mrf.mxu0
  %v79 = vadd.f32 %v51, %v78
  %80 = vdwg.mxu0
  %v82 = vperm.slane %v26, 0
  %v84 = vadd.f32 %v79, %v82
  %v85 = vmul.f32 %v84, 0.5
  %v86 = vtanh.pop %v85
  %v87 = vadd.f32 %v86, 1.0
  %v88 = vmul.f32 %v87, 0.5
  %v89 = vtanh.pop %v84
  %v90 = vmul.f32 %v88, 0.0
  %92 = vrot.lane.b32.xlu0 %v89, 64
  %v93 = vpop.permute.xlu0 %92
  %v95 = vmul.f32 %v88, %v93
  %97 = vrot.lane.b32.xlu0 %v95, 32
  %v98 = vpop.permute.xlu0 %97
  %v100 = vadd.f32 %v90, %v98
  %v101 = vtanh.pop %v100
  %103 = vrot.lane.b32.xlu0 %v101, 64
  %v104 = vpop.permute.xlu0 %103
  %v106 = vmul.f32 %v88, %v104
  %v108 = vrot.slane %v106, 1
  %v109 = vperm.slane %v106, 0
  %v110 = vperm.slane %v108, 0
  %111 = vrot.lane.b32.xlu0 %v109, 32
  %v112 = vpop.permute.xlu0 %111
  %113 = vrot.lane.b32.xlu0 %v110, 32
  %v114 = vpop.permute.xlu0 %113
  %vm117 = vcmask 253952
  %118 = vst.msk [vmem:[%s4] sm:$0x1] %vm117, %v112
  %119 = vst.msk [vmem:[%s4 + $0x8] sm:$0x1] %vm117, %v114
  %v120 = vld [vmem:[%s0 + $0x1] sm:$0x1]
  %v121 = vld [vmem:[%s0 + $0x9] sm:$0x1]
  %122 = vrot.lane.b32.xlu0 %v106, 32
  %v123 = vpop.permute.xlu0 %122
  %v124 = vsel %vm29, %v123, 0
  %126 = vmatpush.msra.mxu0 0.0
  %127 = vmatpush.msra.mxu0 0.0
  %128 = vmatpush.msra.mxu0 0.0
  %129 = vmatpush.msra.mxu0 0.0
  %130 = vmatpush.msra.mxu0 0.0
  %131 = vmatpush.msra.mxu0 0.0
  %132 = vmatpush.msra.mxu0 0.0
  %133 = vmatpush.msra.mxu0 0.0
  %134 = vmatpush.msra.mxu0 0.0
  %135 = vmatpush.msra.mxu0 0.0
  %136 = vmatpush.msra.mxu0 0.0
  %137 = vmatpush.msra.mxu0 0.0
  %138 = vmatpush.msra.mxu0 %v25
  %139 = vmatpush.msra.mxu0 %v24
  %140 = vmatpush.msra.mxu0 %v23
  %141 = vmatpush.msra.mxu0 %v22
  %142 = vmatmul.f32.gmra.mxu0 %v124
  %v143 = vpop.f32.mrf.mxu0
  %v144 = vadd.f32 0.0, %v143
  %145 = vdwg.mxu0
  %v148 = vrot.slane %v121, 7
  %v149 = vsel %vm56, %v148, %v120
  %v150 = vsel %vm58, %v149, 0
  %152 = vmatpush.msra.mxu0 0.0
  %153 = vmatpush.msra.mxu0 0.0
  %154 = vmatpush.msra.mxu0 0.0
  %155 = vmatpush.msra.mxu0 0.0
  %156 = vmatpush.msra.mxu0 0.0
  %157 = vmatpush.msra.mxu0 0.0
  %158 = vmatpush.msra.mxu0 0.0
  %159 = vmatpush.msra.mxu0 0.0
  %160 = vmatpush.msra.mxu0 0.0
  %161 = vmatpush.msra.mxu0 0.0
  %162 = vmatpush.msra.mxu0 0.0
  %163 = vmatpush.msra.mxu0 0.0
  %164 = vmatpush.msra.mxu0 0.0
  %165 = vmatpush.msra.mxu0 0.0
  %166 = vmatpush.msra.mxu0 %v21
  %167 = vmatpush.msra.mxu0 %v20
  %168 = vmatmul.f32.gmra.mxu0 %v150
  %v169 = vpop.f32.mrf.mxu0
  %v170 = vadd.f32 %v144, %v169
  %171 = vdwg.mxu0
  %v172 = vadd.f32 %v170, %v82
  %v173 = vmul.f32 %v172, 0.5
  %v174 = vtanh.pop %v173
  %v175 = vadd.f32 %v174, 1.0
  %v176 = vmul.f32 %v175, 0.5
  %v177 = vtanh.pop %v172
  %v178 = vmul.f32 %v176, %v100
  %180 = vrot.lane.b32.xlu0 %v177, 64
  %v181 = vpop.permute.xlu0 %180
  %v183 = vmul.f32 %v176, %v181
  %185 = vrot.lane.b32.xlu0 %v183, 32
  %v186 = vpop.permute.xlu0 %185
  %v188 = vadd.f32 %v178, %v186
  %v189 = vtanh.pop %v188
  %191 = vrot.lane.b32.xlu0 %v189, 64
  %v192 = vpop.permute.xlu0 %191
  %v194 = vmul.f32 %v176, %v192
  %v196 = vrot.slane %v194, 1
  %v197 = vperm.slane %v194, 0
  %v198 = vperm.slane %v196, 0
  %199 = vrot.lane.b32.xlu0 %v197, 32
  %v200 = vpop.permute.xlu0 %199
  %201 = vrot.lane.b32.xlu0 %v198, 32
  %v202 = vpop.permute.xlu0 %201
  %205 = vst.msk [vmem:[%s4 + $0x1] sm:$0x1] %vm117, %v200
  %206 = vst.msk [vmem:[%s4 + $0x9] sm:$0x1] %vm117, %v202
  %v207 = vld [vmem:[%s0 + $0x2] sm:$0x1]
  %v208 = vld [vmem:[%s0 + $0xa] sm:$0x1]
  %209 = vrot.lane.b32.xlu0 %v194, 32
  %v210 = vpop.permute.xlu0 %209
  %v211 = vsel %vm29, %v210, 0
  %213 = vmatpush.msra.mxu0 0.0
  %214 = vmatpush.msra.mxu0 0.0
  %215 = vmatpush.msra.mxu0 0.0
  %216 = vmatpush.msra.mxu0 0.0
  %217 = vmatpush.msra.mxu0 0.0
  %218 = vmatpush.msra.mxu0 0.0
  %219 = vmatpush.msra.mxu0 0.0
  %220 = vmatpush.msra.mxu0 0.0
  %221 = vmatpush.msra.mxu0 0.0
  %222 = vmatpush.msra.mxu0 0.0
  %223 = vmatpush.msra.mxu0 0.0
  %224 = vmatpush.msra.mxu0 0.0
  %225 = vmatpush.msra.mxu0 %v25
  %226 = vmatpush.msra.mxu0 %v24
  %227 = vmatpush.msra.mxu0 %v23
  %228 = vmatpush.msra.mxu0 %v22
  %229 = vmatmul.f32.gmra.mxu0 %v211
  %v230 = vpop.f32.mrf.mxu0
  %v231 = vadd.f32 0.0, %v230
  %232 = vdwg.mxu0
  %v235 = vrot.slane %v208, 7
  %v236 = vsel %vm56, %v235, %v207
  %v237 = vsel %vm58, %v236, 0
  %239 = vmatpush.msra.mxu0 0.0
  %240 = vmatpush.msra.mxu0 0.0
  %241 = vmatpush.msra.mxu0 0.0
  %242 = vmatpush.msra.mxu0 0.0
  %243 = vmatpush.msra.mxu0 0.0
  %244 = vmatpush.msra.mxu0 0.0
  %245 = vmatpush.msra.mxu0 0.0
  %246 = vmatpush.msra.mxu0 0.0
  %247 = vmatpush.msra.mxu0 0.0
  %248 = vmatpush.msra.mxu0 0.0
  %249 = vmatpush.msra.mxu0 0.0
  %250 = vmatpush.msra.mxu0 0.0
  %251 = vmatpush.msra.mxu0 0.0
  %252 = vmatpush.msra.mxu0 0.0
  %253 = vmatpush.msra.mxu0 %v21
  %254 = vmatpush.msra.mxu0 %v20
  %255 = vmatmul.f32.gmra.mxu0 %v237
  %v256 = vpop.f32.mrf.mxu0
  %v257 = vadd.f32 %v231, %v256
  %258 = vdwg.mxu0
  %v259 = vadd.f32 %v257, %v82
  %v260 = vmul.f32 %v259, 0.5
  %v261 = vtanh.pop %v260
  %v262 = vadd.f32 %v261, 1.0
  %v263 = vmul.f32 %v262, 0.5
  %v264 = vtanh.pop %v259
  %v265 = vmul.f32 %v263, %v188
  %267 = vrot.lane.b32.xlu0 %v264, 64
  %v268 = vpop.permute.xlu0 %267
  %v270 = vmul.f32 %v263, %v268
  %272 = vrot.lane.b32.xlu0 %v270, 32
  %v273 = vpop.permute.xlu0 %272
  %v275 = vadd.f32 %v265, %v273
  %v276 = vtanh.pop %v275
  %278 = vrot.lane.b32.xlu0 %v276, 64
  %v279 = vpop.permute.xlu0 %278
  %v281 = vmul.f32 %v263, %v279
  %v283 = vrot.slane %v281, 1
  %v284 = vperm.slane %v281, 0
  %v285 = vperm.slane %v283, 0
  %286 = vrot.lane.b32.xlu0 %v284, 32
  %v287 = vpop.permute.xlu0 %286
  %288 = vrot.lane.b32.xlu0 %v285, 32
  %v289 = vpop.permute.xlu0 %288
  %292 = vst.msk [vmem:[%s4 + $0x2] sm:$0x1] %vm117, %v287
  %293 = vst.msk [vmem:[%s4 + $0xa] sm:$0x1] %vm117, %v289
  %v294 = vld [vmem:[%s0 + $0x3] sm:$0x1]
  %v295 = vld [vmem:[%s0 + $0xb] sm:$0x1]
  %296 = vrot.lane.b32.xlu0 %v281, 32
  %v297 = vpop.permute.xlu0 %296
  %v298 = vsel %vm29, %v297, 0
  %300 = vmatpush.msra.mxu0 0.0
  %301 = vmatpush.msra.mxu0 0.0
  %302 = vmatpush.msra.mxu0 0.0
  %303 = vmatpush.msra.mxu0 0.0
  %304 = vmatpush.msra.mxu0 0.0
  %305 = vmatpush.msra.mxu0 0.0
  %306 = vmatpush.msra.mxu0 0.0
  %307 = vmatpush.msra.mxu0 0.0
  %308 = vmatpush.msra.mxu0 0.0
  %309 = vmatpush.msra.mxu0 0.0
  %310 = vmatpush.msra.mxu0 0.0
  %311 = vmatpush.msra.mxu0 0.0
  %312 = vmatpush.msra.mxu0 %v25
  %313 = vmatpush.msra.mxu0 %v24
  %314 = vmatpush.msra.mxu0 %v23
  %315 = vmatpush.msra.mxu0 %v22
  %316 = vmatmul.f32.gmra.mxu0 %v298
  %v317 = vpop.f32.mrf.mxu0
  %v318 = vadd.f32 0.0, %v317
  %319 = vdwg.mxu0
  %v322 = vrot.slane %v295, 7
  %v323 = vsel %vm56, %v322, %v294
  %v324 = vsel %vm58, %v323, 0
  %326 = vmatpush.msra.mxu0 0.0
  %327 = vmatpush.msra.mxu0 0.0
  %328 = vmatpush.msra.mxu0 0.0
  %329 = vmatpush.msra.mxu0 0.0
  %330 = vmatpush.msra.mxu0 0.0
  %331 = vmatpush.msra.mxu0 0.0
  %332 = vmatpush.msra.mxu0 0.0
  %333 = vmatpush.msra.mxu0 0.0
  %334 = vmatpush.msra.mxu0 0.0
  %335 = vmatpush.msra.mxu0 0.0
  %336 = vmatpush.msra.mxu0 0.0
  %337 = vmatpush.msra.mxu0 0.0
  %338 = vmatpush.msra.mxu0 0.0
  %339 = vmatpush.msra.mxu0 0.0
  %340 = vmatpush.msra.mxu0 %v21
  %341 = vmatpush.msra.mxu0 %v20
  %342 = vmatmul.f32.gmra.mxu0 %v324
  %v343 = vpop.f32.mrf.mxu0
  %v344 = vadd.f32 %v318, %v343
  %345 = vdwg.mxu0
  %v346 = vadd.f32 %v344, %v82
  %v347 = vmul.f32 %v346, 0.5
  %v348 = vtanh.pop %v347
  %v349 = vadd.f32 %v348, 1.0
  %v350 = vmul.f32 %v349, 0.5
  %v351 = vtanh.pop %v346
  %v352 = vmul.f32 %v350, %v275
  %354 = vrot.lane.b32.xlu0 %v351, 64
  %v355 = vpop.permute.xlu0 %354
  %v357 = vmul.f32 %v350, %v355
  %359 = vrot.lane.b32.xlu0 %v357, 32
  %v360 = vpop.permute.xlu0 %359
  %v362 = vadd.f32 %v352, %v360
  %v363 = vtanh.pop %v362
  %365 = vrot.lane.b32.xlu0 %v363, 64
  %v366 = vpop.permute.xlu0 %365
  %v368 = vmul.f32 %v350, %v366
  %v370 = vrot.slane %v368, 1
  %v371 = vperm.slane %v368, 0
  %v372 = vperm.slane %v370, 0
  %373 = vrot.lane.b32.xlu0 %v371, 32
  %v374 = vpop.permute.xlu0 %373
  %375 = vrot.lane.b32.xlu0 %v372, 32
  %v376 = vpop.permute.xlu0 %375
  %379 = vst.msk [vmem:[%s4 + $0x3] sm:$0x1] %vm117, %v374
  %380 = vst.msk [vmem:[%s4 + $0xb] sm:$0x1] %vm117, %v376
  %v381 = vld [vmem:[%s0 + $0x4] sm:$0x1]
  %v382 = vld [vmem:[%s0 + $0xc] sm:$0x1]
  %383 = vrot.lane.b32.xlu0 %v368, 32
  %v384 = vpop.permute.xlu0 %383
  %v385 = vsel %vm29, %v384, 0
  %387 = vmatpush.msra.mxu0 0.0
  %388 = vmatpush.msra.mxu0 0.0
  %389 = vmatpush.msra.mxu0 0.0
  %390 = vmatpush.msra.mxu0 0.0
  %391 = vmatpush.msra.mxu0 0.0
  %392 = vmatpush.msra.mxu0 0.0
  %393 = vmatpush.msra.mxu0 0.0
  %394 = vmatpush.msra.mxu0 0.0
  %395 = vmatpush.msra.mxu0 0.0
  %396 = vmatpush.msra.mxu0 0.0
  %397 = vmatpush.msra.mxu0 0.0
  %398 = vmatpush.msra.mxu0 0.0
  %399 = vmatpush.msra.mxu0 %v25
  %400 = vmatpush.msra.mxu0 %v24
  %401 = vmatpush.msra.mxu0 %v23
  %402 = vmatpush.msra.mxu0 %v22
  %403 = vmatmul.f32.gmra.mxu0 %v385
  %v404 = vpop.f32.mrf.mxu0
  %v405 = vadd.f32 0.0, %v404
  %406 = vdwg.mxu0
  %v409 = vrot.slane %v382, 7
  %v410 = vsel %vm56, %v409, %v381
  %v411 = vsel %vm58, %v410, 0
  %413 = vmatpush.msra.mxu0 0.0
  %414 = vmatpush.msra.mxu0 0.0
  %415 = vmatpush.msra.mxu0 0.0
  %416 = vmatpush.msra.mxu0 0.0
  %417 = vmatpush.msra.mxu0 0.0
  %418 = vmatpush.msra.mxu0 0.0
  %419 = vmatpush.msra.mxu0 0.0
  %420 = vmatpush.msra.mxu0 0.0
  %421 = vmatpush.msra.mxu0 0.0
  %422 = vmatpush.msra.mxu0 0.0
  %423 = vmatpush.msra.mxu0 0.0
  %424 = vmatpush.msra.mxu0 0.0
  %425 = vmatpush.msra.mxu0 0.0
  %426 = vmatpush.msra.mxu0 0.0
  %427 = vmatpush.msra.mxu0 %v21
  %428 = vmatpush.msra.mxu0 %v20
  %429 = vmatmul.f32.gmra.mxu0 %v411
  %v430 = vpop.f32.mrf.mxu0
  %v431 = vadd.f32 %v405, %v430
  %432 = vdwg.mxu0
  %v433 = vadd.f32 %v431, %v82
  %v434 = vmul.f32 %v433, 0.5
  %v435 = vtanh.pop %v434
  %v436 = vadd.f32 %v435, 1.0
  %v437 = vmul.f32 %v436, 0.5
  %v438 = vtanh.pop %v433
  %v439 = vmul.f32 %v437, %v362
  %441 = vrot.lane.b32.xlu0 %v438, 64
  %v442 = vpop.permute.xlu0 %441
  %v444 = vmul.f32 %v437, %v442
  %446 = vrot.lane.b32.xlu0 %v444, 32
  %v447 = vpop.permute.xlu0 %446
  %v449 = vadd.f32 %v439, %v447
  %v450 = vtanh.pop %v449
  %452 = vrot.lane.b32.xlu0 %v450, 64
  %v453 = vpop.permute.xlu0 %452
  %v455 = vmul.f32 %v437, %v453
  %v457 = vrot.slane %v455, 1
  %v458 = vperm.slane %v455, 0
  %v459 = vperm.slane %v457, 0
  %460 = vrot.lane.b32.xlu0 %v458, 32
  %v461 = vpop.permute.xlu0 %460
  %462 = vrot.lane.b32.xlu0 %v459, 32
  %v463 = vpop.permute.xlu0 %462
  %466 = vst.msk [vmem:[%s4 + $0x4] sm:$0x1] %vm117, %v461
  %467 = vst.msk [vmem:[%s4 + $0xc] sm:$0x1] %vm117, %v463
  %v468 = vld [vmem:[%s0 + $0x5] sm:$0x1]
  %v469 = vld [vmem:[%s0 + $0xd] sm:$0x1]
  %470 = vrot.lane.b32.xlu0 %v455, 32
  %v471 = vpop.permute.xlu0 %470
  %v472 = vsel %vm29, %v471, 0
  %474 = vmatpush.msra.mxu0 0.0
  %475 = vmatpush.msra.mxu0 0.0
  %476 = vmatpush.msra.mxu0 0.0
  %477 = vmatpush.msra.mxu0 0.0
  %478 = vmatpush.msra.mxu0 0.0
  %479 = vmatpush.msra.mxu0 0.0
  %480 = vmatpush.msra.mxu0 0.0
  %481 = vmatpush.msra.mxu0 0.0
  %482 = vmatpush.msra.mxu0 0.0
  %483 = vmatpush.msra.mxu0 0.0
  %484 = vmatpush.msra.mxu0 0.0
  %485 = vmatpush.msra.mxu0 0.0
  %486 = vmatpush.msra.mxu0 %v25
  %487 = vmatpush.msra.mxu0 %v24
  %488 = vmatpush.msra.mxu0 %v23
  %489 = vmatpush.msra.mxu0 %v22
  %490 = vmatmul.f32.gmra.mxu0 %v472
  %v491 = vpop.f32.mrf.mxu0
  %v492 = vadd.f32 0.0, %v491
  %493 = vdwg.mxu0
  %v496 = vrot.slane %v469, 7
  %v497 = vsel %vm56, %v496, %v468
  %v498 = vsel %vm58, %v497, 0
  %500 = vmatpush.msra.mxu0 0.0
  %501 = vmatpush.msra.mxu0 0.0
  %502 = vmatpush.msra.mxu0 0.0
  %503 = vmatpush.msra.mxu0 0.0
  %504 = vmatpush.msra.mxu0 0.0
  %505 = vmatpush.msra.mxu0 0.0
  %506 = vmatpush.msra.mxu0 0.0
  %507 = vmatpush.msra.mxu0 0.0
  %508 = vmatpush.msra.mxu0 0.0
  %509 = vmatpush.msra.mxu0 0.0
  %510 = vmatpush.msra.mxu0 0.0
  %511 = vmatpush.msra.mxu0 0.0
  %512 = vmatpush.msra.mxu0 0.0
  %513 = vmatpush.msra.mxu0 0.0
  %514 = vmatpush.msra.mxu0 %v21
  %515 = vmatpush.msra.mxu0 %v20
  %516 = vmatmul.f32.gmra.mxu0 %v498
  %v517 = vpop.f32.mrf.mxu0
  %v518 = vadd.f32 %v492, %v517
  %519 = vdwg.mxu0
  %v520 = vadd.f32 %v518, %v82
  %v521 = vmul.f32 %v520, 0.5
  %v522 = vtanh.pop %v521
  %v523 = vadd.f32 %v522, 1.0
  %v524 = vmul.f32 %v523, 0.5
  %v525 = vtanh.pop %v520
  %v526 = vmul.f32 %v524, %v449
  %528 = vrot.lane.b32.xlu0 %v525, 64
  %v529 = vpop.permute.xlu0 %528
  %v531 = vmul.f32 %v524, %v529
  %533 = vrot.lane.b32.xlu0 %v531, 32
  %v534 = vpop.permute.xlu0 %533
  %v536 = vadd.f32 %v526, %v534
  %v537 = vtanh.pop %v536
  %539 = vrot.lane.b32.xlu0 %v537, 64
  %v540 = vpop.permute.xlu0 %539
  %v542 = vmul.f32 %v524, %v540
  %v544 = vrot.slane %v542, 1
  %v545 = vperm.slane %v542, 0
  %v546 = vperm.slane %v544, 0
  %547 = vrot.lane.b32.xlu0 %v545, 32
  %v548 = vpop.permute.xlu0 %547
  %549 = vrot.lane.b32.xlu0 %v546, 32
  %v550 = vpop.permute.xlu0 %549
  %553 = vst.msk [vmem:[%s4 + $0x5] sm:$0x1] %vm117, %v548
  %554 = vst.msk [vmem:[%s4 + $0xd] sm:$0x1] %vm117, %v550
  %v555 = vld [vmem:[%s0 + $0x6] sm:$0x1]
  %v556 = vld [vmem:[%s0 + $0xe] sm:$0x1]
  %557 = vrot.lane.b32.xlu0 %v542, 32
  %v558 = vpop.permute.xlu0 %557
  %v559 = vsel %vm29, %v558, 0
  %561 = vmatpush.msra.mxu0 0.0
  %562 = vmatpush.msra.mxu0 0.0
  %563 = vmatpush.msra.mxu0 0.0
  %564 = vmatpush.msra.mxu0 0.0
  %565 = vmatpush.msra.mxu0 0.0
  %566 = vmatpush.msra.mxu0 0.0
  %567 = vmatpush.msra.mxu0 0.0
  %568 = vmatpush.msra.mxu0 0.0
  %569 = vmatpush.msra.mxu0 0.0
  %570 = vmatpush.msra.mxu0 0.0
  %571 = vmatpush.msra.mxu0 0.0
  %572 = vmatpush.msra.mxu0 0.0
  %573 = vmatpush.msra.mxu0 %v25
  %574 = vmatpush.msra.mxu0 %v24
  %575 = vmatpush.msra.mxu0 %v23
  %576 = vmatpush.msra.mxu0 %v22
  %577 = vmatmul.f32.gmra.mxu0 %v559
  %v578 = vpop.f32.mrf.mxu0
  %v579 = vadd.f32 0.0, %v578
  %580 = vdwg.mxu0
  %v583 = vrot.slane %v556, 7
  %v584 = vsel %vm56, %v583, %v555
  %v585 = vsel %vm58, %v584, 0
  %587 = vmatpush.msra.mxu0 0.0
  %588 = vmatpush.msra.mxu0 0.0
  %589 = vmatpush.msra.mxu0 0.0
  %590 = vmatpush.msra.mxu0 0.0
  %591 = vmatpush.msra.mxu0 0.0
  %592 = vmatpush.msra.mxu0 0.0
  %593 = vmatpush.msra.mxu0 0.0
  %594 = vmatpush.msra.mxu0 0.0
  %595 = vmatpush.msra.mxu0 0.0
  %596 = vmatpush.msra.mxu0 0.0
  %597 = vmatpush.msra.mxu0 0.0
  %598 = vmatpush.msra.mxu0 0.0
  %599 = vmatpush.msra.mxu0 0.0
  %600 = vmatpush.msra.mxu0 0.0
  %601 = vmatpush.msra.mxu0 %v21
  %602 = vmatpush.msra.mxu0 %v20
  %603 = vmatmul.f32.gmra.mxu0 %v585
  %v604 = vpop.f32.mrf.mxu0
  %v605 = vadd.f32 %v579, %v604
  %606 = vdwg.mxu0
  %v607 = vadd.f32 %v605, %v82
  %v608 = vmul.f32 %v607, 0.5
  %v609 = vtanh.pop %v608
  %v610 = vadd.f32 %v609, 1.0
  %v611 = vmul.f32 %v610, 0.5
  %v612 = vtanh.pop %v607
  %v613 = vmul.f32 %v611, %v536
  %615 = vrot.lane.b32.xlu0 %v612, 64
  %v616 = vpop.permute.xlu0 %615
  %v618 = vmul.f32 %v611, %v616
  %620 = vrot.lane.b32.xlu0 %v618, 32
  %v621 = vpop.permute.xlu0 %620
  %v623 = vadd.f32 %v613, %v621
  %v624 = vtanh.pop %v623
  %626 = vrot.lane.b32.xlu0 %v624, 64
  %v627 = vpop.permute.xlu0 %626
  %v629 = vmul.f32 %v611, %v627
  %v631 = vrot.slane %v629, 1
  %v632 = vperm.slane %v629, 0
  %v633 = vperm.slane %v631, 0
  %634 = vrot.lane.b32.xlu0 %v632, 32
  %v635 = vpop.permute.xlu0 %634
  %636 = vrot.lane.b32.xlu0 %v633, 32
  %v637 = vpop.permute.xlu0 %636
  %640 = vst.msk [vmem:[%s4 + $0x6] sm:$0x1] %vm117, %v635
  %641 = vst.msk [vmem:[%s4 + $0xe] sm:$0x1] %vm117, %v637
  %v642 = vld [vmem:[%s0 + $0x7] sm:$0x1]
  %v643 = vld [vmem:[%s0 + $0xf] sm:$0x1]
  %644 = vrot.lane.b32.xlu0 %v629, 32
  %v645 = vpop.permute.xlu0 %644
  %v646 = vsel %vm29, %v645, 0
  %648 = vmatpush.msra.mxu0 0.0
  %649 = vmatpush.msra.mxu0 0.0
  %650 = vmatpush.msra.mxu0 0.0
  %651 = vmatpush.msra.mxu0 0.0
  %652 = vmatpush.msra.mxu0 0.0
  %653 = vmatpush.msra.mxu0 0.0
  %654 = vmatpush.msra.mxu0 0.0
  %655 = vmatpush.msra.mxu0 0.0
  %656 = vmatpush.msra.mxu0 0.0
  %657 = vmatpush.msra.mxu0 0.0
  %658 = vmatpush.msra.mxu0 0.0
  %659 = vmatpush.msra.mxu0 0.0
  %660 = vmatpush.msra.mxu0 %v25
  %661 = vmatpush.msra.mxu0 %v24
  %662 = vmatpush.msra.mxu0 %v23
  %663 = vmatpush.msra.mxu0 %v22
  %664 = vmatmul.f32.gmra.mxu0 %v646
  %v665 = vpop.f32.mrf.mxu0
  %v666 = vadd.f32 0.0, %v665
  %667 = vdwg.mxu0
  %v670 = vrot.slane %v643, 7
  %v671 = vsel %vm56, %v670, %v642
  %v672 = vsel %vm58, %v671, 0
  %674 = vmatpush.msra.mxu0 0.0
  %675 = vmatpush.msra.mxu0 0.0
  %676 = vmatpush.msra.mxu0 0.0
  %677 = vmatpush.msra.mxu0 0.0
  %678 = vmatpush.msra.mxu0 0.0
  %679 = vmatpush.msra.mxu0 0.0
  %680 = vmatpush.msra.mxu0 0.0
  %681 = vmatpush.msra.mxu0 0.0
  %682 = vmatpush.msra.mxu0 0.0
  %683 = vmatpush.msra.mxu0 0.0
  %684 = vmatpush.msra.mxu0 0.0
  %685 = vmatpush.msra.mxu0 0.0
  %686 = vmatpush.msra.mxu0 0.0
  %687 = vmatpush.msra.mxu0 0.0
  %688 = vmatpush.msra.mxu0 %v21
  %689 = vmatpush.msra.mxu0 %v20
  %690 = vmatmul.f32.gmra.mxu0 %v672
  %v691 = vpop.f32.mrf.mxu0
  %v692 = vadd.f32 %v666, %v691
  %693 = vdwg.mxu0
  %v694 = vadd.f32 %v692, %v82
  %v695 = vmul.f32 %v694, 0.5
  %v696 = vtanh.pop %v695
  %v697 = vadd.f32 %v696, 1.0
  %v698 = vmul.f32 %v697, 0.5
  %v699 = vtanh.pop %v694
  %v700 = vmul.f32 %v698, %v623
  %702 = vrot.lane.b32.xlu0 %v699, 64
  %v703 = vpop.permute.xlu0 %702
  %v705 = vmul.f32 %v698, %v703
  %707 = vrot.lane.b32.xlu0 %v705, 32
  %v708 = vpop.permute.xlu0 %707
  %v710 = vadd.f32 %v700, %v708
  %v711 = vtanh.pop %v710
  %713 = vrot.lane.b32.xlu0 %v711, 64
  %v714 = vpop.permute.xlu0 %713
  %v716 = vmul.f32 %v698, %v714
  %v718 = vrot.slane %v716, 1
  %v719 = vperm.slane %v716, 0
  %v720 = vperm.slane %v718, 0
  %721 = vrot.lane.b32.xlu0 %v719, 32
  %v722 = vpop.permute.xlu0 %721
  %723 = vrot.lane.b32.xlu0 %v720, 32
  %v724 = vpop.permute.xlu0 %723
  %727 = vst.msk [vmem:[%s4 + $0x7] sm:$0x1] %vm117, %v722
  %728 = vst.msk [vmem:[%s4 + $0xf] sm:$0x1] %vm117, %v724
  %729 = vrot.lane.b32.xlu0 %v716, 32
  %v730 = vpop.permute.xlu0 %729
  %vm732 = vcmask 254976
  %733 = vst.msk [vmem:[%s5] sm:$0x3] %vm732, %v730
  %735 = vrot.lane.b32.xlu0 %v710, 96
  %v736 = vpop.permute.xlu0 %735
  %738 = vst.msk [vmem:[%s6] sm:$0x3] %vm732, %v736
  // Predicated region
  $region18: #{_forward_train.2} parent=0 // pred_check
    _
  $region19: #{_forward_train.2} parent=0 // pred_check_branch
    %740 = sbr.rel (0) target = $region21
  $region20: #{_forward_train.2} parent=0 // pred_region
    _
  $region21: #{_forward_train.2} parent=0 // pred_fallthru
    _
  // Predicated region
  $region22: #{_forward_train.2} parent=0 // pred_check
    _
  $region23: #{_forward_train.2} parent=0 // pred_check_branch
    %742 = sbr.rel (0) target = $region25
  $region24: #{_forward_train.2} parent=0 // pred_region
    _
  $region25: #{_forward_train.2} parent=0 // pred_fallthru
    _
  // Predicated region
  $region26: #{_forward_train.2} parent=0 // pred_check
    _
  $region27: #{_forward_train.2} parent=0 // pred_check_branch
    %744 = sbr.rel (0) target = $region29
  $region28: #{_forward_train.2} parent=0 // pred_region
    _
  $region29: #{_forward_train.2} parent=0 // pred_fallthru
    _
  // Predicated region
  $region30: #{_forward_train.2} parent=0 // pred_check
    _
  $region31: #{_forward_train.2} parent=0 // pred_check_branch
    %746 = sbr.rel (0) target = $region33
  $region32: #{_forward_train.2} parent=0 // pred_region
    _
  $region33: #{_forward_train.2} parent=0 // pred_fallthru
    _
  // Predicated region
  $region34: #{_forward_train.2} parent=0 // pred_check
    _
  $region35: #{_forward_train.2} parent=0 // pred_check_branch
    %748 = sbr.rel (0) target = $region37
  $region36: #{_forward_train.2} parent=0 // pred_region
    _
  $region37: #{_forward_train.2} parent=0 // pred_fallthru
    _
  // Predicated region
  $region38: #{_forward_train.2} parent=0 // pred_check
    _
  $region39: #{_forward_train.2} parent=0 // pred_check_branch
    %750 = sbr.rel (0) target = $region41
  $region40: #{_forward_train.2} parent=0 // pred_region
    _
  $region41: #{_forward_train.2} parent=0 // pred_fallthru
    _

// kernel: _forward_train.3
$region0: #{_forward_train.3}
  #allocation0 [shape = 'u32[]', space=smem, size = 0x4, offset = 0x4, fixed_abs, tag = 'smem constant byte address 0x4 - core index']
  #allocation1 [shape = 'u32[72,128]{1,0:T(1,128)}', space=vmem, size = 0x9000, scoped, tag = 'internal scratch']
  #allocation2 [shape = 'f32[2,32]{1,0:T(2,128)}', space=vmem, size = 0x400, scoped, tag = 'scratch operand']
  #allocation3 [shape = 'f32[2,32]{1,0:T(2,128)}', space=vmem, size = 0x400, scoped, tag = 'scratch operand']
  %s0 = inlined_call_operand.vmem [shape: f32[5,2,16], index: 0, kind: input, shape index: {}]
  %s1 = inlined_call_operand.vmem [shape: f32[2,8,32], index: 1, kind: input, shape index: {}]
  %s2 = inlined_call_operand.vmem [shape: f32[2,8], index: 2, kind: input, shape index: {}]
  %s3 = inlined_call_operand.vmem [shape: f32[2,32], index: 3, kind: input, shape index: {}]
  %s4 = inlined_call_operand.vmem [shape: f32[2,32], index: 4, kind: input, shape index: {}]
  %s5 = inlined_call_operand.vmem [shape: f32[32,32], index: 5, kind: input, shape index: {}]
  %s6 = inlined_call_operand.vmem [shape: f32[16,128], index: 6, kind: input, shape index: {}]
  %s7 = inlined_call_operand.vmem [shape: f32[32,128], index: 7, kind: input, shape index: {}]
  %s8 = inlined_call_operand.vmem [shape: f32[32,128], index: 8, kind: input, shape index: {}]
  %s9 = inlined_call_operand.vmem [shape: f32[1,128], index: 9, kind: input, shape index: {}]
  %s10 = inlined_call_operand.vmem [shape: f32[32,128], index: 10, kind: input, shape index: {}]
  %s11 = inlined_call_operand.vmem [shape: f32[32,128], index: 11, kind: input, shape index: {}]
  %s12 = inlined_call_operand.vmem [shape: f32[1,128], index: 12, kind: input, shape index: {}]
  %s13 = inlined_call_operand.vmem [shape: f32[5,2,128], index: 13, kind: output, shape index: {}]
  %s14 = sld [smem:[#allocation0]]
  $region89: #{_forward_train.3} parent=0
    _
  %s16 = ssub.s32 1, %s14
  %s17 = scalar_select 0, %s16, %s14
  loop: start=0, step=1, limit=7
  $region2: #{_forward_train.3} parent=0 // loop_pre_header
    _
  $region3: #{_forward_train.3} parent=0 // loop_header
    %s19 = sphi 0, %s23
    %p20 = scmp.ge.s32.totalorder %s19, 7
    %s29 = sphi 0, %s31
    %s32 = sphi 0, %s29
    %s33 = sphi 0, %s32
    %s49 = sphi 0, %s33
    %s53 = sphi 0, %s53
    %s55 = sphi 0, %s53
    %s56 = sphi 0, %s55
    %s70 = sphi 0, %s56
    %s74 = sphi 0, %s74
    %s76 = sphi 0, %s74
    %s77 = sphi 0, %s76
    %s91 = sphi 0, %s77
    %s95 = sphi 0, %s95
    %s97 = sphi 0, %s95
    %s98 = sphi 0, %s97
    %s112 = sphi 0, %s98
    %s116 = sphi 0, %s116
    %s118 = sphi 0, %s116
    %s119 = sphi 0, %s118
    %s133 = sphi 0, %s119
    %s137 = sphi 0, %s137
    %s139 = sphi 0, %s137
    %s140 = sphi 0, %s139
    %s154 = sphi 0, %s140
    %s158 = sphi 0, %s158
    %s160 = sphi 0, %s158
    %s161 = sphi 0, %s160
    %s175 = sphi 0, %s161
    %s179 = sphi 0, %s179
    %s181 = sphi 0, %s179
    %s182 = sphi 0, %s181
    %s196 = sphi 0, %s182
    %s200 = sphi 0, %s200
    %s202 = sphi 0, %s200
    %s203 = sphi 0, %s202
    %s217 = sphi 0, %s203
    %s221 = sphi 0, %s221
    %s223 = sphi 0, %s221
    %s224 = sphi 0, %s223
    %s238 = sphi 0, %s224
    %s242 = sphi 0, %s242
    %s244 = sphi 0, %s242
    %s245 = sphi 0, %s244
    %s259 = sphi 0, %s245
    %s263 = sphi 0, %s263
    %s265 = sphi 0, %s263
    %s266 = sphi 0, %s265
    %s280 = sphi 0, %s266
    %s284 = sphi 0, %s284
    %s286 = sphi 0, %s284
    %s287 = sphi 0, %s286
    %s301 = sphi 0, %s287
    %s307 = sphi 0, %s309
    %s310 = sphi 0, %s307
    %s311 = sphi 0, %s310
    %s327 = sphi 0, %s311
  $region4: #{_forward_train.3} parent=0 // loop_header_branch
    %22 = sbr.rel (%p20) target = $region8
  $region5: #{_forward_train.3} parent=0 // loop_body
    %s24 = ssub.s32 %s19, 1
    %s25 = ssub.s32 %s19, 2
    %s26 = sadd.s32 %s19, 1
    %s27 = ssub.s32 %s19, %s26
    %p28 = scmp.eq.s32.totalorder %s27, 0
    %s30 = sadd.s32 %s29, 1
    %s31 = scalar_select %p28, %s29, %s30
    %p34 = pneg %p28
    %p35 = scmp.eq.s32.totalorder %s19, 4
    %p36 = por %p34, %p35
    %p37 = scmp.ne.s32.totalorder %s29, %s32
    %p38 = scmp.eq.s32.totalorder %s19, 0
    %p39 = por %p37, %p38
    %p40 = scmp.ne.s32.totalorder %s29, %s32
    %p41 = scmp.eq.s32.totalorder %s24, 4
    %p42 = por %p40, %p41
    %p43 = scmp.ne.s32.totalorder %s32, %s33
    %p44 = scmp.eq.s32.totalorder %s24, 0
    %p45 = por %p43, %p44
    %p46 = scmp.ne.s32.totalorder %s32, %s33
    %p47 = scmp.eq.s32.totalorder %s25, 4
    %p48 = por %p46, %p47
    %p50 = scmp.ne.s32.totalorder %s33, %s49
    %p51 = scmp.eq.s32.totalorder %s25, 0
    %p52 = por %p50, %p51
    %s54 = sadd.s32 %s53, 1
    %p57 = scmp.eq.s32.totalorder %s19, 4
    %p58 = scmp.ne.s32.totalorder %s53, %s55
    %p59 = scmp.eq.s32.totalorder %s19, 0
    %p60 = por %p58, %p59
    %p61 = scmp.ne.s32.totalorder %s53, %s55
    %p62 = scmp.eq.s32.totalorder %s24, 4
    %p63 = por %p61, %p62
    %p64 = scmp.ne.s32.totalorder %s55, %s56
    %p65 = scmp.eq.s32.totalorder %s24, 0
    %p66 = por %p64, %p65
    %p67 = scmp.ne.s32.totalorder %s55, %s56
    %p68 = scmp.eq.s32.totalorder %s25, 4
    %p69 = por %p67, %p68
    %p71 = scmp.ne.s32.totalorder %s56, %s70
    %p72 = scmp.eq.s32.totalorder %s25, 0
    %p73 = por %p71, %p72
    %s75 = sadd.s32 %s74, 1
    %p78 = scmp.eq.s32.totalorder %s19, 4
    %p79 = scmp.ne.s32.totalorder %s74, %s76
    %p80 = scmp.eq.s32.totalorder %s19, 0
    %p81 = por %p79, %p80
    %p82 = scmp.ne.s32.totalorder %s74, %s76
    %p83 = scmp.eq.s32.totalorder %s24, 4
    %p84 = por %p82, %p83
    %p85 = scmp.ne.s32.totalorder %s76, %s77
    %p86 = scmp.eq.s32.totalorder %s24, 0
    %p87 = por %p85, %p86
    %p88 = scmp.ne.s32.totalorder %s76, %s77
    %p89 = scmp.eq.s32.totalorder %s25, 4
    %p90 = por %p88, %p89
    %p92 = scmp.ne.s32.totalorder %s77, %s91
    %p93 = scmp.eq.s32.totalorder %s25, 0
    %p94 = por %p92, %p93
    %s96 = sadd.s32 %s95, 1
    %p99 = scmp.eq.s32.totalorder %s19, 4
    %p100 = scmp.ne.s32.totalorder %s95, %s97
    %p101 = scmp.eq.s32.totalorder %s19, 0
    %p102 = por %p100, %p101
    %p103 = scmp.ne.s32.totalorder %s95, %s97
    %p104 = scmp.eq.s32.totalorder %s24, 4
    %p105 = por %p103, %p104
    %p106 = scmp.ne.s32.totalorder %s97, %s98
    %p107 = scmp.eq.s32.totalorder %s24, 0
    %p108 = por %p106, %p107
    %p109 = scmp.ne.s32.totalorder %s97, %s98
    %p110 = scmp.eq.s32.totalorder %s25, 4
    %p111 = por %p109, %p110
    %p113 = scmp.ne.s32.totalorder %s98, %s112
    %p114 = scmp.eq.s32.totalorder %s25, 0
    %p115 = por %p113, %p114
    %s117 = sadd.s32 %s116, 1
    %p120 = scmp.eq.s32.totalorder %s19, 4
    %p121 = scmp.ne.s32.totalorder %s116, %s118
    %p122 = scmp.eq.s32.totalorder %s19, 0
    %p123 = por %p121, %p122
    %p124 = scmp.ne.s32.totalorder %s116, %s118
    %p125 = scmp.eq.s32.totalorder %s24, 4
    %p126 = por %p124, %p125
    %p127 = scmp.ne.s32.totalorder %s118, %s119
    %p128 = scmp.eq.s32.totalorder %s24, 0
    %p129 = por %p127, %p128
    %p130 = scmp.ne.s32.totalorder %s118, %s119
    %p131 = scmp.eq.s32.totalorder %s25, 4
    %p132 = por %p130, %p131
    %p134 = scmp.ne.s32.totalorder %s119, %s133
    %p135 = scmp.eq.s32.totalorder %s25, 0
    %p136 = por %p134, %p135
    %s138 = sadd.s32 %s137, 1
    %p141 = scmp.eq.s32.totalorder %s19, 4
    %p142 = scmp.ne.s32.totalorder %s137, %s139
    %p143 = scmp.eq.s32.totalorder %s19, 0
    %p144 = por %p142, %p143
    %p145 = scmp.ne.s32.totalorder %s137, %s139
    %p146 = scmp.eq.s32.totalorder %s24, 4
    %p147 = por %p145, %p146
    %p148 = scmp.ne.s32.totalorder %s139, %s140
    %p149 = scmp.eq.s32.totalorder %s24, 0
    %p150 = por %p148, %p149
    %p151 = scmp.ne.s32.totalorder %s139, %s140
    %p152 = scmp.eq.s32.totalorder %s25, 4
    %p153 = por %p151, %p152
    %p155 = scmp.ne.s32.totalorder %s140, %s154
    %p156 = scmp.eq.s32.totalorder %s25, 0
    %p157 = por %p155, %p156
    %s159 = sadd.s32 %s158, 1
    %p162 = scmp.eq.s32.totalorder %s19, 4
    %p163 = scmp.ne.s32.totalorder %s158, %s160
    %p164 = scmp.eq.s32.totalorder %s19, 0
    %p165 = por %p163, %p164
    %p166 = scmp.ne.s32.totalorder %s158, %s160
    %p167 = scmp.eq.s32.totalorder %s24, 4
    %p168 = por %p166, %p167
    %p169 = scmp.ne.s32.totalorder %s160, %s161
    %p170 = scmp.eq.s32.totalorder %s24, 0
    %p171 = por %p169, %p170
    %p172 = scmp.ne.s32.totalorder %s160, %s161
    %p173 = scmp.eq.s32.totalorder %s25, 4
    %p174 = por %p172, %p173
    %p176 = scmp.ne.s32.totalorder %s161, %s175
    %p177 = scmp.eq.s32.totalorder %s25, 0
    %p178 = por %p176, %p177
    %s180 = sadd.s32 %s179, 1
    %p183 = scmp.eq.s32.totalorder %s19, 4
    %p184 = scmp.ne.s32.totalorder %s179, %s181
    %p185 = scmp.eq.s32.totalorder %s19, 0
    %p186 = por %p184, %p185
    %p187 = scmp.ne.s32.totalorder %s179, %s181
    %p188 = scmp.eq.s32.totalorder %s24, 4
    %p189 = por %p187, %p188
    %p190 = scmp.ne.s32.totalorder %s181, %s182
    %p191 = scmp.eq.s32.totalorder %s24, 0
    %p192 = por %p190, %p191
    %p193 = scmp.ne.s32.totalorder %s181, %s182
    %p194 = scmp.eq.s32.totalorder %s25, 4
    %p195 = por %p193, %p194
    %p197 = scmp.ne.s32.totalorder %s182, %s196
    %p198 = scmp.eq.s32.totalorder %s25, 0
    %p199 = por %p197, %p198
    %s201 = sadd.s32 %s200, 1
    %p204 = scmp.eq.s32.totalorder %s19, 4
    %p205 = scmp.ne.s32.totalorder %s200, %s202
    %p206 = scmp.eq.s32.totalorder %s19, 0
    %p207 = por %p205, %p206
    %p208 = scmp.ne.s32.totalorder %s200, %s202
    %p209 = scmp.eq.s32.totalorder %s24, 4
    %p210 = por %p208, %p209
    %p211 = scmp.ne.s32.totalorder %s202, %s203
    %p212 = scmp.eq.s32.totalorder %s24, 0
    %p213 = por %p211, %p212
    %p214 = scmp.ne.s32.totalorder %s202, %s203
    %p215 = scmp.eq.s32.totalorder %s25, 4
    %p216 = por %p214, %p215
    %p218 = scmp.ne.s32.totalorder %s203, %s217
    %p219 = scmp.eq.s32.totalorder %s25, 0
    %p220 = por %p218, %p219
    %s222 = sadd.s32 %s221, 1
    %p225 = scmp.eq.s32.totalorder %s19, 4
    %p226 = scmp.ne.s32.totalorder %s221, %s223
    %p227 = scmp.eq.s32.totalorder %s19, 0
    %p228 = por %p226, %p227
    %p229 = scmp.ne.s32.totalorder %s221, %s223
    %p230 = scmp.eq.s32.totalorder %s24, 4
    %p231 = por %p229, %p230
    %p232 = scmp.ne.s32.totalorder %s223, %s224
    %p233 = scmp.eq.s32.totalorder %s24, 0
    %p234 = por %p232, %p233
    %p235 = scmp.ne.s32.totalorder %s223, %s224
    %p236 = scmp.eq.s32.totalorder %s25, 4
    %p237 = por %p235, %p236
    %p239 = scmp.ne.s32.totalorder %s224, %s238
    %p240 = scmp.eq.s32.totalorder %s25, 0
    %p241 = por %p239, %p240
    %s243 = sadd.s32 %s242, 1
    %p246 = scmp.eq.s32.totalorder %s19, 4
    %p247 = scmp.ne.s32.totalorder %s242, %s244
    %p248 = scmp.eq.s32.totalorder %s19, 0
    %p249 = por %p247, %p248
    %p250 = scmp.ne.s32.totalorder %s242, %s244
    %p251 = scmp.eq.s32.totalorder %s24, 4
    %p252 = por %p250, %p251
    %p253 = scmp.ne.s32.totalorder %s244, %s245
    %p254 = scmp.eq.s32.totalorder %s24, 0
    %p255 = por %p253, %p254
    %p256 = scmp.ne.s32.totalorder %s244, %s245
    %p257 = scmp.eq.s32.totalorder %s25, 4
    %p258 = por %p256, %p257
    %p260 = scmp.ne.s32.totalorder %s245, %s259
    %p261 = scmp.eq.s32.totalorder %s25, 0
    %p262 = por %p260, %p261
    %s264 = sadd.s32 %s263, 1
    %p267 = scmp.eq.s32.totalorder %s19, 4
    %p268 = scmp.ne.s32.totalorder %s263, %s265
    %p269 = scmp.eq.s32.totalorder %s19, 0
    %p270 = por %p268, %p269
    %p271 = scmp.ne.s32.totalorder %s263, %s265
    %p272 = scmp.eq.s32.totalorder %s24, 4
    %p273 = por %p271, %p272
    %p274 = scmp.ne.s32.totalorder %s265, %s266
    %p275 = scmp.eq.s32.totalorder %s24, 0
    %p276 = por %p274, %p275
    %p277 = scmp.ne.s32.totalorder %s265, %s266
    %p278 = scmp.eq.s32.totalorder %s25, 4
    %p279 = por %p277, %p278
    %p281 = scmp.ne.s32.totalorder %s266, %s280
    %p282 = scmp.eq.s32.totalorder %s25, 0
    %p283 = por %p281, %p282
    %s285 = sadd.s32 %s284, 1
    %p288 = scmp.eq.s32.totalorder %s19, 4
    %p289 = scmp.ne.s32.totalorder %s284, %s286
    %p290 = scmp.eq.s32.totalorder %s19, 0
    %p291 = por %p289, %p290
    %p292 = scmp.ne.s32.totalorder %s284, %s286
    %p293 = scmp.eq.s32.totalorder %s24, 4
    %p294 = por %p292, %p293
    %p295 = scmp.ne.s32.totalorder %s286, %s287
    %p296 = scmp.eq.s32.totalorder %s24, 0
    %p297 = por %p295, %p296
    %p298 = scmp.ne.s32.totalorder %s286, %s287
    %p299 = scmp.eq.s32.totalorder %s25, 4
    %p300 = por %p298, %p299
    %p302 = scmp.ne.s32.totalorder %s287, %s301
    %p303 = scmp.eq.s32.totalorder %s25, 0
    %p304 = por %p302, %p303
    %s305 = ssub.s32 %s19, %s26
    %p306 = scmp.eq.s32.totalorder %s305, 0
    %s308 = sadd.s32 %s307, 1
    %s309 = scalar_select %p306, %s307, %s308
    %p312 = pneg %p306
    %p313 = scmp.eq.s32.totalorder %s19, 4
    %p314 = por %p312, %p313
    %p315 = scmp.ne.s32.totalorder %s307, %s310
    %p316 = scmp.eq.s32.totalorder %s19, 0
    %p317 = por %p315, %p316
    %p318 = scmp.ne.s32.totalorder %s307, %s310
    %p319 = scmp.eq.s32.totalorder %s24, 4
    %p320 = por %p318, %p319
    %p321 = scmp.ne.s32.totalorder %s310, %s311
    %p322 = scmp.eq.s32.totalorder %s24, 0
    %p323 = por %p321, %p322
    %p324 = scmp.ne.s32.totalorder %s310, %s311
    %p325 = scmp.eq.s32.totalorder %s25, 4
    %p326 = por %p324, %p325
    %p328 = scmp.ne.s32.totalorder %s311, %s327
    %p329 = scmp.eq.s32.totalorder %s25, 0
    %p330 = por %p328, %p329
    %p331 = scmp.le.s32.totalorder 1, %s19
    %p332 = scmp.lt.s32.totalorder %s19, 6
    %p333 = pnand %p331, %p332
    %p334 = pneg %p333
    // Predicated region
    $region9: #{_forward_train.3} parent=5 // pred_check
      _
    $region10: #{_forward_train.3} parent=5 // pred_check_branch
      %336 = sbr.rel (%p333) target = $region12
    $region11: #{_forward_train.3} parent=5 // pred_region
      %s337 = ssub.s32 %s19, 1
      // Predicated region
      $region13: #{_forward_train.3} parent=11 // pred_check
        %p338 = pneg %p66
      $region14: #{_forward_train.3} parent=11 // pred_check_branch
        %340 = sbr.rel (%p338) target = $region16
      $region15: #{_forward_train.3} parent=11 // pred_region
        _
      $region16: #{_forward_train.3} parent=11 // pred_fallthru
        _
      // Predicated region
      $region17: #{_forward_train.3} parent=11 // pred_check
        %p341 = pneg %p87
      $region18: #{_forward_train.3} parent=11 // pred_check_branch
        %343 = sbr.rel (%p341) target = $region20
      $region19: #{_forward_train.3} parent=11 // pred_region
        _
      $region20: #{_forward_train.3} parent=11 // pred_fallthru
        _
      // Predicated region
      $region21: #{_forward_train.3} parent=11 // pred_check
        %p344 = pneg %p108
      $region22: #{_forward_train.3} parent=11 // pred_check_branch
        %346 = sbr.rel (%p344) target = $region24
      $region23: #{_forward_train.3} parent=11 // pred_region
        _
      $region24: #{_forward_train.3} parent=11 // pred_fallthru
        _
      // Predicated region
      $region25: #{_forward_train.3} parent=11 // pred_check
        %p347 = pneg %p129
      $region26: #{_forward_train.3} parent=11 // pred_check_branch
        %349 = sbr.rel (%p347) target = $region28
      $region27: #{_forward_train.3} parent=11 // pred_region
        _
      $region28: #{_forward_train.3} parent=11 // pred_fallthru
        _
      // Predicated region
      $region29: #{_forward_train.3} parent=11 // pred_check
        %p350 = pneg %p150
      $region30: #{_forward_train.3} parent=11 // pred_check_branch
        %352 = sbr.rel (%p350) target = $region32
      $region31: #{_forward_train.3} parent=11 // pred_region
        _
      $region32: #{_forward_train.3} parent=11 // pred_fallthru
        _
      // Predicated region
      $region33: #{_forward_train.3} parent=11 // pred_check
        %p353 = pneg %p171
      $region34: #{_forward_train.3} parent=11 // pred_check_branch
        %355 = sbr.rel (%p353) target = $region36
      $region35: #{_forward_train.3} parent=11 // pred_region
        _
      $region36: #{_forward_train.3} parent=11 // pred_fallthru
        _
      // Predicated region
      $region37: #{_forward_train.3} parent=11 // pred_check
        %p356 = pneg %p192
      $region38: #{_forward_train.3} parent=11 // pred_check_branch
        %358 = sbr.rel (%p356) target = $region40
      $region39: #{_forward_train.3} parent=11 // pred_region
        _
      $region40: #{_forward_train.3} parent=11 // pred_fallthru
        _
      // Predicated region
      $region41: #{_forward_train.3} parent=11 // pred_check
        %p359 = pneg %p213
      $region42: #{_forward_train.3} parent=11 // pred_check_branch
        %361 = sbr.rel (%p359) target = $region44
      $region43: #{_forward_train.3} parent=11 // pred_region
        _
      $region44: #{_forward_train.3} parent=11 // pred_fallthru
        _
      // Predicated region
      $region45: #{_forward_train.3} parent=11 // pred_check
        %p362 = pneg %p234
      $region46: #{_forward_train.3} parent=11 // pred_check_branch
        %364 = sbr.rel (%p362) target = $region48
      $region47: #{_forward_train.3} parent=11 // pred_region
        _
      $region48: #{_forward_train.3} parent=11 // pred_fallthru
        _
      // Predicated region
      $region49: #{_forward_train.3} parent=11 // pred_check
        %p365 = pneg %p255
      $region50: #{_forward_train.3} parent=11 // pred_check_branch
        %367 = sbr.rel (%p365) target = $region52
      $region51: #{_forward_train.3} parent=11 // pred_region
        _
      $region52: #{_forward_train.3} parent=11 // pred_fallthru
        _
      // Predicated region
      $region53: #{_forward_train.3} parent=11 // pred_check
        %p368 = pneg %p276
      $region54: #{_forward_train.3} parent=11 // pred_check_branch
        %370 = sbr.rel (%p368) target = $region56
      $region55: #{_forward_train.3} parent=11 // pred_region
        _
      $region56: #{_forward_train.3} parent=11 // pred_fallthru
        _
      // Predicated region
      $region57: #{_forward_train.3} parent=11 // pred_check
        %p371 = pneg %p297
      $region58: #{_forward_train.3} parent=11 // pred_check_branch
        %373 = sbr.rel (%p371) target = $region60
      $region59: #{_forward_train.3} parent=11 // pred_region
        _
      $region60: #{_forward_train.3} parent=11 // pred_fallthru
        _
    $region12: #{_forward_train.3} parent=5 // pred_fallthru
      _
    %p374 = scmp.lt.s32.totalorder %s19, 5
    // Predicated region
    $region61: #{_forward_train.3} parent=5 // pred_check
      %p375 = pneg %p374
    $region62: #{_forward_train.3} parent=5 // pred_check_branch
      %377 = sbr.rel (%p375) target = $region64
    $region63: #{_forward_train.3} parent=5 // pred_region
      // Predicated region
      $region65: #{_forward_train.3} parent=63 // pred_check
        %p378 = pneg %p39
      $region66: #{_forward_train.3} parent=63 // pred_check_branch
        %380 = sbr.rel (%p378) target = $region68
      $region67: #{_forward_train.3} parent=63 // pred_region
        %p381 = scmp.lt.s32.totalorder %s19, 4
        %s382 = scalar_select %p381, %s19, 4
        %s383 = smul.addr %s382, 2
        %s384 = scalar_lea.vmem %s0, %s383
      $region68: #{_forward_train.3} parent=63 // pred_fallthru
        _
    $region64: #{_forward_train.3} parent=5 // pred_fallthru
      _
    %p385 = scmp.le.s32.totalorder 1, %s19
    %p386 = scmp.lt.s32.totalorder %s19, 6
    %p387 = pnand %p385, %p386
    %p388 = pneg %p387
    // Predicated region
    $region69: #{_forward_train.3} parent=5 // pred_check
      _
    $region70: #{_forward_train.3} parent=5 // pred_check_branch
      %390 = sbr.rel (%p387) target = $region72
    $region71: #{_forward_train.3} parent=5 // pred_region
      %s391 = ssub.s32 %s19, 1
      %p392 = scmp.lt.s32.totalorder %s24, 4
      %s393 = scalar_select %p392, %s24, 4
      %s394 = smul.addr %s393, 2
      %s395 = scalar_lea.vmem %s0, %s394
      %p396 = pneg %p45
      %p397 = pneg %p42
      %p398 = pneg %p66
      %p399 = pneg %p63
      %p400 = pneg %p87
      %p401 = pneg %p84
      %p402 = pneg %p108
      %p403 = pneg %p105
      %p404 = pneg %p129
      %p405 = pneg %p126
      %p406 = pneg %p150
      %p407 = pneg %p147
      %p408 = pneg %p171
      %p409 = pneg %p168
      %p410 = pneg %p192
      %p411 = pneg %p189
      %p412 = pneg %p213
      %p413 = pneg %p210
      %p414 = pneg %p234
      %p415 = pneg %p231
      %p416 = pneg %p255
      %p417 = pneg %p252
      %p418 = pneg %p276
      %p419 = pneg %p273
      %p420 = pneg %p297
      %p421 = pneg %p294
      %p422 = pneg %p323
      %p423 = pneg %p320
      %p424 = scmp.lt.s32.totalorder %s24, 4
      %s425 = scalar_select %p424, %s24, 4
      %s426 = smul.addr %s425, 2
      %s427 = scalar_lea.vmem %s13, %s426
      %p428 = scmp.lt.s32.totalorder %s24, 4
      %s429 = scalar_select %p428, %s24, 4
      %s430 = smul.addr %s429, 2
      %s431 = scalar_lea.vmem %s0, %s430
      %p432 = scmp.lt.s32.totalorder %s24, 4
      %s433 = scalar_select %p432, %s24, 4
      %s434 = smul.addr %s433, 2
      %s435 = scalar_lea.vmem %s13, %s434
      %p436 = scmp.eq.s32.totalorder %s24, 0
      // Predicated region
      $region73: #{_forward_train.3} parent=71 // pred_check
        %p437 = pneg %p436
      $region74: #{_forward_train.3} parent=71 // pred_check_branch
        %439 = sbr.rel (%p437) target = $region76
      $region75: #{_forward_train.3} parent=71 // pred_region
        %v440 = vld [vmem:[%s3] sm:$0x3]
        %vm441 = vcmask 254976
        %442 = vst.msk [vmem:[#allocation2] sm:$0x3] %vm441, %v440
        %v443 = vld [vmem:[%s4] sm:$0x3]
        %444 = vst.msk [vmem:[#allocation3] sm:$0x3] %vm441, %v443
      $region76: #{_forward_train.3} parent=71 // pred_fallthru
        _
      %v445 = vld [vmem:[%s431] sm:$0x3]
      %v446 = vld [vmem:[#allocation2] sm:$0x3]
      %v447 = vld [vmem:[#allocation3] sm:$0x3]
      %v448 = vld [vmem:[%s1] sm:$0xff]
      %v449 = vld [vmem:[%s1 + $0x8] sm:$0xff]
      %v450 = vld [vmem:[%s2] sm:$0x3]
      %v451 = vld [vmem:[%s5] sm:$0xff]
      %v452 = vld [vmem:[%s5 + $0x8] sm:$0xff]
      %v453 = vld [vmem:[%s5 + $0x10] sm:$0xff]
      %v454 = vld [vmem:[%s5 + $0x18] sm:$0xff]
      %vm455 = vcmask 261120
      %v457 = vsel %vm455, %v446, 0
      %459 = vmatpush.msra.mxu0 0.0
      %460 = vmatpush.msra.mxu0 0.0
      %461 = vmatpush.msra.mxu0 0.0
      %462 = vmatpush.msra.mxu0 0.0
      %463 = vmatpush.msra.mxu0 0.0
      %464 = vmatpush.msra.mxu0 0.0
      %465 = vmatpush.msra.mxu0 0.0
      %466 = vmatpush.msra.mxu0 0.0
      %467 = vmatpush.msra.mxu0 0.0
      %468 = vmatpush.msra.mxu0 0.0
      %469 = vmatpush.msra.mxu0 0.0
      %470 = vmatpush.msra.mxu0 0.0
      %471 = vmatpush.msra.mxu0 %v454
      %472 = vmatpush.msra.mxu0 %v453
      %473 = vmatpush.msra.mxu0 %v452
      %474 = vmatpush.msra.mxu0 %v451
      %475 = vmatmul.f32.gmra.mxu0 %v457
      %v476 = vpop.f32.mrf.mxu0
      %v477 = vadd.f32 0.0, %v476
      %478 = vdwg.mxu0
      %v480 = vrot.slane %v477, 1
      %v481 = vsel %vm455, %v477, 0
      %v484 = vsel %vm455, %v448, 0
      %486 = vmatpush.xpose.msra.mxu0 0.0
      %487 = vmatpush.xpose.msra.mxu0 0.0
      %488 = vmatpush.xpose.msra.mxu0 0.0
      %489 = vmatpush.xpose.msra.mxu0 0.0
      %490 = vmatpush.xpose.msra.mxu0 0.0
      %491 = vmatpush.xpose.msra.mxu0 0.0
      %492 = vmatpush.xpose.msra.mxu0 0.0
      %493 = vmatpush.xpose.msra.mxu0 0.0
      %494 = vmatpush.xpose.msra.mxu0 0.0
      %495 = vmatpush.xpose.msra.mxu0 0.0
      %496 = vmatpush.xpose.msra.mxu0 0.0
      %497 = vmatpush.xpose.msra.mxu0 0.0
      %498 = vmatpush.xpose.msra.mxu0 0.0
      %499 = vmatpush.xpose.msra.mxu0 0.0
      %500 = vmatpush.xpose.msra.mxu0 0.0
      %501 = vmatpush.xpose.msra.mxu0 %v484
      %502 = vmatmul.f32.gmra.mxu0 %v481
      %v503 = vpop.f32.mrf.mxu0
      %v504 = vadd.f32 0.0, %v503
      %505 = vdwg.mxu0
      %v506 = vsel %vm455, %v480, 0
      %v509 = vsel %vm455, %v449, 0
      %511 = vmatpush.xpose.msra.mxu0 0.0
      %512 = vmatpush.xpose.msra.mxu0 0.0
      %513 = vmatpush.xpose.msra.mxu0 0.0
      %514 = vmatpush.xpose.msra.mxu0 0.0
      %515 = vmatpush.xpose.msra.mxu0 0.0
      %516 = vmatpush.xpose.msra.mxu0 0.0
      %517 = vmatpush.xpose.msra.mxu0 0.0
      %518 = vmatpush.xpose.msra.mxu0 0.0
      %519 = vmatpush.xpose.msra.mxu0 0.0
      %520 = vmatpush.xpose.msra.mxu0 0.0
      %521 = vmatpush.xpose.msra.mxu0 0.0
      %522 = vmatpush.xpose.msra.mxu0 0.0
      %523 = vmatpush.xpose.msra.mxu0 0.0
      %524 = vmatpush.xpose.msra.mxu0 0.0
      %525 = vmatpush.xpose.msra.mxu0 0.0
      %526 = vmatpush.xpose.msra.mxu0 %v509
      %527 = vmatmul.f32.gmra.mxu0 %v506
      %v528 = vpop.f32.mrf.mxu0
      %v529 = vadd.f32 0.0, %v528
      %530 = vdwg.mxu0
      %v532 = vrot.slane %v450, 1
      %vm534 = vcmp.gt.f32.partialorder %v450, 0.5
      %vm535 = vcmp.gt.f32.partialorder %v532, 0.5
      %v536 = vsel %vm534, %v504, -1e+09
      %v537 = vsel %vm535, %v529, -1e+09
      %vm538 = vcmask 57344
      %v539 = vsel %vm538, %v536, -inf
      %540 = vmax.xlane.f32.xlu0 %v539
      %v541 = vpop.xlane.xlu0 %540
      %v542 = vsel %vm538, %v537, -inf
      %543 = vmax.xlane.f32.xlu0 %v542
      %v544 = vpop.xlane.xlu0 %543
      %v545 = vsub.f32 %v536, %v541
      %v546 = vsub.f32 %v537, %v544
      %v547 = vmul.f32 %v545, 1.442695
      %v548 = vpow.pop %v547
      %v549 = vmul.f32 %v546, 1.442695
      %v550 = vpow.pop %v549
      %v551 = vsel %vm538, %v548, 0.0
      %552 = vadd.xlane.f32.xlu0 %v551
      %v553 = vpop.xlane.xlu0 %552
      %v554 = vsel %vm538, %v550, 0.0
      %555 = vadd.xlane.f32.xlu0 %v554
      %v556 = vpop.xlane.xlu0 %555
      %v557 = vrcp.pop %v553
      %v558 = vrcp.pop %v556
      %v559 = vmul.f32 %v548, %v557
      %v560 = vmul.f32 %v550, %v558
      %vm561 = vcmask 64512
      %v563 = vsel %vm561, %v559, 0
      %565 = vmatpush.msra.mxu0 0.0
      %566 = vmatpush.msra.mxu0 0.0
      %567 = vmatpush.msra.mxu0 0.0
      %568 = vmatpush.msra.mxu0 0.0
      %569 = vmatpush.msra.mxu0 0.0
      %570 = vmatpush.msra.mxu0 0.0
      %571 = vmatpush.msra.mxu0 0.0
      %572 = vmatpush.msra.mxu0 0.0
      %573 = vmatpush.msra.mxu0 0.0
      %574 = vmatpush.msra.mxu0 0.0
      %575 = vmatpush.msra.mxu0 0.0
      %576 = vmatpush.msra.mxu0 0.0
      %577 = vmatpush.msra.mxu0 0.0
      %578 = vmatpush.msra.mxu0 0.0
      %579 = vmatpush.msra.mxu0 0.0
      %580 = vmatpush.msra.mxu0 %v448
      %581 = vmatmul.f32.gmra.mxu0 %v563
      %v582 = vpop.f32.mrf.mxu0
      %v583 = vadd.f32 0.0, %v582
      %584 = vdwg.mxu0
      %v586 = vsel %vm561, %v560, 0
      %588 = vmatpush.msra.mxu0 0.0
      %589 = vmatpush.msra.mxu0 0.0
      %590 = vmatpush.msra.mxu0 0.0
      %591 = vmatpush.msra.mxu0 0.0
      %592 = vmatpush.msra.mxu0 0.0
      %593 = vmatpush.msra.mxu0 0.0
      %594 = vmatpush.msra.mxu0 0.0
      %595 = vmatpush.msra.mxu0 0.0
      %596 = vmatpush.msra.mxu0 0.0
      %597 = vmatpush.msra.mxu0 0.0
      %598 = vmatpush.msra.mxu0 0.0
      %599 = vmatpush.msra.mxu0 0.0
      %600 = vmatpush.msra.mxu0 0.0
      %601 = vmatpush.msra.mxu0 0.0
      %602 = vmatpush.msra.mxu0 0.0
      %603 = vmatpush.msra.mxu0 %v449
      %604 = vmatmul.f32.gmra.mxu0 %v586
      %v605 = vpop.f32.mrf.mxu0
      %v606 = vadd.f32 0.0, %v605
      %607 = vdwg.mxu0
      %v608 = vld [vmem:[%s6] sm:$0xff]
      %v609 = vld [vmem:[%s6 + $0x8] sm:$0xff]
      %v610 = vld [vmem:[%s7] sm:$0xff]
      %v611 = vld [vmem:[%s7 + $0x8] sm:$0xff]
      %v612 = vld [vmem:[%s7 + $0x10] sm:$0xff]
      %v613 = vld [vmem:[%s7 + $0x18] sm:$0xff]
      %v616 = vrot.slane %v606, 7
      %vm617 = vcmask 1041409
      %v618 = vsel %vm617, %v616, %v583
      %v619 = vsel %vm455, %v618, 0
      %621 = vmatpush.msra.mxu0 0.0
      %622 = vmatpush.msra.mxu0 0.0
      %623 = vmatpush.msra.mxu0 0.0
      %624 = vmatpush.msra.mxu0 0.0
      %625 = vmatpush.msra.mxu0 0.0
      %626 = vmatpush.msra.mxu0 0.0
      %627 = vmatpush.msra.mxu0 0.0
      %628 = vmatpush.msra.mxu0 0.0
      %629 = vmatpush.msra.mxu0 0.0
      %630 = vmatpush.msra.mxu0 0.0
      %631 = vmatpush.msra.mxu0 0.0
      %632 = vmatpush.msra.mxu0 0.0
      %633 = vmatpush.msra.mxu0 %v613
      %634 = vmatpush.msra.mxu0 %v612
      %635 = vmatpush.msra.mxu0 %v611
      %636 = vmatpush.msra.mxu0 %v610
      %637 = vmatmul.f32.gmra.mxu0 %v619
      %v638 = vpop.f32.mrf.mxu0
      %v639 = vadd.f32 0.0, %v638
      %640 = vdwg.mxu0
      %vm641 = vcmask 130048
      %v643 = vsel %vm641, %v445, 0
      %645 = vmatpush.msra.mxu0 0.0
      %646 = vmatpush.msra.mxu0 0.0
      %647 = vmatpush.msra.mxu0 0.0
      %648 = vmatpush.msra.mxu0 0.0
      %649 = vmatpush.msra.mxu0 0.0
      %650 = vmatpush.msra.mxu0 0.0
      %651 = vmatpush.msra.mxu0 0.0
      %652 = vmatpush.msra.mxu0 0.0
      %653 = vmatpush.msra.mxu0 0.0
      %654 = vmatpush.msra.mxu0 0.0
      %655 = vmatpush.msra.mxu0 0.0
      %656 = vmatpush.msra.mxu0 0.0
      %657 = vmatpush.msra.mxu0 0.0
      %658 = vmatpush.msra.mxu0 0.0
      %659 = vmatpush.msra.mxu0 %v609
      %660 = vmatpush.msra.mxu0 %v608
      %661 = vmatmul.f32.gmra.mxu0 %v643
      %v662 = vpop.f32.mrf.mxu0
      %v663 = vadd.f32 %v639, %v662
      %664 = vdwg.mxu0
      %v665 = vld [vmem:[%s8] sm:$0xff]
      %v666 = vld [vmem:[%s8 + $0x8] sm:$0xff]
      %v667 = vld [vmem:[%s8 + $0x10] sm:$0xff]
      %v668 = vld [vmem:[%s8 + $0x18] sm:$0xff]
      %669 = vmatpush.msra.mxu0 0.0
      %670 = vmatpush.msra.mxu0 0.0
      %671 = vmatpush.msra.mxu0 0.0
      %672 = vmatpush.msra.mxu0 0.0
      %673 = vmatpush.msra.mxu0 0.0
      %674 = vmatpush.msra.mxu0 0.0
      %675 = vmatpush.msra.mxu0 0.0
      %676 = vmatpush.msra.mxu0 0.0
      %677 = vmatpush.msra.mxu0 0.0
      %678 = vmatpush.msra.mxu0 0.0
      %679 = vmatpush.msra.mxu0 0.0
      %680 = vmatpush.msra.mxu0 0.0
      %681 = vmatpush.msra.mxu0 %v668
      %682 = vmatpush.msra.mxu0 %v667
      %683 = vmatpush.msra.mxu0 %v666
      %684 = vmatpush.msra.mxu0 %v665
      %685 = vmatmul.f32.gmra.mxu0 %v457
      %v686 = vpop.f32.mrf.mxu0
      %v687 = vadd.f32 0.0, %v686
      %688 = vdwg.mxu0
      %v689 = vadd.f32 %v663, %v687
      %v690 = vld [vmem:[%s9] sm:$0x1]
      %v692 = vperm.slane %v690, 0
      %v694 = vadd.f32 %v689, %v692
      %v695 = vmul.f32 %v694, 0.5
      %v696 = vtanh.pop %v695
      %v697 = vadd.f32 %v696, 1.0
      %v698 = vmul.f32 %v697, 0.5
      %v699 = vtanh.pop %v694
      %701 = vrot.lane.b32.xlu0 %v447, 32
      %v702 = vpop.permute.xlu0 %701
      %v704 = vmul.f32 %v698, %v702
      %706 = vrot.lane.b32.xlu0 %v699, 64
      %v707 = vpop.permute.xlu0 %706
      %v709 = vmul.f32 %v698, %v707
      %711 = vrot.lane.b32.xlu0 %v709, 32
      %v712 = vpop.permute.xlu0 %711
      %v714 = vadd.f32 %v704, %v712
      %v715 = vtanh.pop %v714
      %717 = vrot.lane.b32.xlu0 %v715, 64
      %v718 = vpop.permute.xlu0 %717
      %v720 = vmul.f32 %v698, %v718
      %722 = vrot.lane.b32.xlu0 %v720, 32
      %v723 = vpop.permute.xlu0 %722
      %vm725 = vcmask 254976
      %726 = vst.msk [vmem:[#allocation2] sm:$0x3] %vm725, %v723
      %728 = vrot.lane.b32.xlu0 %v714, 96
      %v729 = vpop.permute.xlu0 %728
      %731 = vst.msk [vmem:[#allocation3] sm:$0x3] %vm725, %v729
      %v732 = vld [vmem:[%s10] sm:$0xff]
      %v733 = vld [vmem:[%s10 + $0x8] sm:$0xff]
      %v734 = vld [vmem:[%s10 + $0x10] sm:$0xff]
      %v735 = vld [vmem:[%s10 + $0x18] sm:$0xff]
      %v736 = vld [vmem:[%s11] sm:$0xff]
      %v737 = vld [vmem:[%s11 + $0x8] sm:$0xff]
      %v738 = vld [vmem:[%s11 + $0x10] sm:$0xff]
      %v739 = vld [vmem:[%s11 + $0x18] sm:$0xff]
      %740 = vmatpush.msra.mxu0 0.0
      %741 = vmatpush.msra.mxu0 0.0
      %742 = vmatpush.msra.mxu0 0.0
      %743 = vmatpush.msra.mxu0 0.0
      %744 = vmatpush.msra.mxu0 0.0
      %745 = vmatpush.msra.mxu0 0.0
      %746 = vmatpush.msra.mxu0 0.0
      %747 = vmatpush.msra.mxu0 0.0
      %748 = vmatpush.msra.mxu0 0.0
      %749 = vmatpush.msra.mxu0 0.0
      %750 = vmatpush.msra.mxu0 0.0
      %751 = vmatpush.msra.mxu0 0.0
      %752 = vmatpush.msra.mxu0 %v739
      %753 = vmatpush.msra.mxu0 %v738
      %754 = vmatpush.msra.mxu0 %v737
      %755 = vmatpush.msra.mxu0 %v736
      %756 = vmatmul.f32.gmra.mxu0 %v619
      %v757 = vpop.f32.mrf.mxu0
      %v758 = vadd.f32 0.0, %v757
      %759 = vdwg.mxu0
      %v760 = vsel %vm455, %v723, 0
      %762 = vmatpush.msra.mxu0 0.0
      %763 = vmatpush.msra.mxu0 0.0
      %764 = vmatpush.msra.mxu0 0.0
      %765 = vmatpush.msra.mxu0 0.0
      %766 = vmatpush.msra.mxu0 0.0
      %767 = vmatpush.msra.mxu0 0.0
      %768 = vmatpush.msra.mxu0 0.0
      %769 = vmatpush.msra.mxu0 0.0
      %770 = vmatpush.msra.mxu0 0.0
      %771 = vmatpush.msra.mxu0 0.0
      %772 = vmatpush.msra.mxu0 0.0
      %773 = vmatpush.msra.mxu0 0.0
      %774 = vmatpush.msra.mxu0 %v735
      %775 = vmatpush.msra.mxu0 %v734
      %776 = vmatpush.msra.mxu0 %v733
      %777 = vmatpush.msra.mxu0 %v732
      %778 = vmatmul.f32.gmra.mxu0 %v760
      %v779 = vpop.f32.mrf.mxu0
      %v780 = vadd.f32 %v758, %v779
      %781 = vdwg.mxu0
      %v782 = vld [vmem:[%s12] sm:$0x1]
      %v784 = vperm.slane %v782, 0
      %v786 = vadd.f32 %v780, %v784
      %787 = vst [vmem:[%s435] sm:$0x3] %v786
      %p788 = scmp.lt.s32.totalorder %s24, 4
      %s789 = scalar_select %p788, %s24, 4
      %s790 = smul.addr %s789, 2
      %s791 = scalar_lea.vmem %s13, %s790
      // Predicated region
      $region77: #{_forward_train.3} parent=71 // pred_check
        %p792 = pneg %p320
      $region78: #{_forward_train.3} parent=71 // pred_check_branch
        %794 = sbr.rel (%p792) target = $region80
      $region79: #{_forward_train.3} parent=71 // pred_region
        _
      $region80: #{_forward_train.3} parent=71 // pred_fallthru
        _
    $region72: #{_forward_train.3} parent=5 // pred_fallthru
      _
    %p795 = scmp.le.s32.totalorder 2, %s19
    // Predicated region
    $region81: #{_forward_train.3} parent=5 // pred_check
      %p796 = pneg %p795
    $region82: #{_forward_train.3} parent=5 // pred_check_branch
      %798 = sbr.rel (%p796) target = $region84
    $region83: #{_forward_train.3} parent=5 // pred_region
      %s799 = ssub.s32 %s19, 2
      // Predicated region
      $region85: #{_forward_train.3} parent=83 // pred_check
        %p800 = pneg %p326
      $region86: #{_forward_train.3} parent=83 // pred_check_branch
        %802 = sbr.rel (%p800) target = $region88
      $region87: #{_forward_train.3} parent=83 // pred_region
        %p803 = scmp.lt.s32.totalorder %s25, 4
        %s804 = scalar_select %p803, %s25, 4
        %s805 = smul.addr %s804, 2
        %s806 = scalar_lea.vmem %s13, %s805
      $region88: #{_forward_train.3} parent=83 // pred_fallthru
        _
    $region84: #{_forward_train.3} parent=5 // pred_fallthru
      _
  $region6: #{_forward_train.3} parent=0 // loop_footer
    %s23 = sadd.s32 1, %s19
  $region7: #{_forward_train.3} parent=0 // loop_footer_branch
    %18 = sbr.rel target = $region3
  $region8: #{_forward_train.3} parent=0 // loop_exit
    _

</llo_original>
